<compile_context>
chip_gen: v7x
topology: tpu7x:2x2x1
jax: 0.10.0
libtpu: 0.0.40
codegen_flags: <defaults>
</compile_context>

<pallas_src>
import jax
import jax.numpy as jnp
from jax.experimental import pallas as pl
from jax.experimental.pallas import tpu as pltpu


def _round_up(x, m):
    return ((x + m - 1) // m) * m


def _linear_sine_kernel(x_ref, w_ref, b_ref, o_ref, acc_ref):
    k = pl.program_id(2)

    @pl.when(k == 0)
    def _init():
        acc_ref[...] = jnp.zeros_like(acc_ref)

    acc_ref[...] += jnp.dot(x_ref[...], w_ref[...],
                            preferred_element_type=jnp.float32)

    @pl.when(k == pl.num_programs(2) - 1)
    def _finalize():
        # omega_0 is already folded into w and b -> just bias-add + sin, all in f32.
        o_ref[...] = jnp.sin(acc_ref[...] + b_ref[...]).astype(o_ref.dtype)


def _choose_tiles(M, K, N, tile_m, tile_n, tile_k):
    # M tile: 2nd-to-last block dim -> multiple of 8 (or full M). Big to amortize
    # per-grid-step overhead.
    tm = M if M <= tile_m else tile_m
    # N tile: last block dim -> multiple of 128 (or full N). Lane-dense output stores.
    tn = N if N <= tile_n else tile_n
    # K tile: must divide K exactly (a partial K block would corrupt the reduction).
    if K <= tile_k:
        tk = K
    else:
        tk = K
        for cand in (tile_k, 1024, 512, 256, 128):
            if cand <= K and K % cand == 0:
                tk = cand
                break
    return tm, tn, tk


def linear_sine(x, w, b, *, out_features=None, tile_m=256, tile_n=256, tile_k=1024,
                mxu_dtype=None, vmem_limit_bytes=64 * 1024 * 1024):
    """Computes y = sin(x @ w + b).

    x: (M, K).  w: (K, N) == omega_0 * W^T.  b: (1, N) == omega_0 * bias.
    out_features: true output width (params may be lane-padded to a multiple of 128);
                  if given and < N, the output is sliced back to this width.
    mxu_dtype:    optionally cast x / w (e.g. jnp.bfloat16) for the MXU on v6e/v7x;
                  accumulation, bias-add and sin stay in f32.
    """
    M, K = x.shape
    K2, N = w.shape
    assert K == K2 and b.shape == (1, N)

    out_dtype = x.dtype
    if mxu_dtype is not None:
        x = x.astype(mxu_dtype)
        w = w.astype(mxu_dtype)
    b = b.astype(jnp.float32)

    tm, tn, tk = _choose_tiles(M, K, N, tile_m, tile_n, tile_k)
    grid = (pl.cdiv(M, tm), pl.cdiv(N, tn), K // tk)

    cost = pl.CostEstimate(
        flops=2 * M * K * N,
        transcendentals=M * N,
        bytes_accessed=(x.size * jnp.dtype(x.dtype).itemsize
                        + w.size * jnp.dtype(w.dtype).itemsize
                        + b.size * 4
                        + M * N * jnp.dtype(out_dtype).itemsize),
    )

    y = pl.pallas_call(
        _linear_sine_kernel,
        out_shape=jax.ShapeDtypeStruct((M, N), out_dtype),
        grid_spec=pltpu.PrefetchScalarGridSpec(
            num_scalar_prefetch=0,
            grid=grid,
            in_specs=[
                pl.BlockSpec((tm, tk), lambda i, j, k: (i, k)),   # x row/K tile
                pl.BlockSpec((tk, tn), lambda i, j, k: (k, j)),   # weight K/N tile
                pl.BlockSpec((1, tn), lambda i, j, k: (0, j)),    # bias N tile
            ],
            out_specs=pl.BlockSpec((tm, tn), lambda i, j, k: (i, j)),
            scratch_shapes=[pltpu.VMEM((tm, tn), jnp.float32)],   # f32 accumulator
        ),
        compiler_params=pltpu.CompilerParams(
            dimension_semantics=("parallel", "parallel", "arbitrary"),
            vmem_limit_bytes=vmem_limit_bytes,
        ),
        cost_estimate=cost,
    )(x, w, b)

    if out_features is not None and out_features < N:
        y = y[:, :out_features]
    return y


def init_linear_sine_params(key, in_features, out_features, *, is_first, omega_0,
                            lane_multiple=128):
    """Re-implements LinearSine.init_weights (+ default nn.Linear bias init).

    Returns ((w_kernel, b_kernel), (w_raw, b_raw)):
      * w_kernel/b_kernel: omega_0-folded, stored as (in, out) == W^T, with the
        output dim zero-padded up to a multiple of `lane_multiple` for lane-dense
        stores (padded columns produce sin(0)=0 and are sliced off by the wrapper).
      * w_raw/b_raw: unscaled, unpadded (for reference-checking against the module).
    """
    kw, kb = jax.random.split(key)
    if is_first:
        bound_w = 1.0 / in_features
    else:
        bound_w = float(jnp.sqrt(6.0 / in_features)) / omega_0
    w_raw = jax.random.uniform(kw, (in_features, out_features), jnp.float32,
                               minval=-bound_w, maxval=bound_w)
    # PyTorch nn.Linear default bias init: U(-1/sqrt(in), 1/sqrt(in)).
    bound_b = 1.0 / float(jnp.sqrt(jnp.float32(in_features)))
    b_raw = jax.random.uniform(kb, (1, out_features), jnp.float32,
                               minval=-bound_b, maxval=bound_b)

    # Fold omega_0 once (removes the per-element multiply inside the kernel).
    w_k = omega_0 * w_raw
    b_k = omega_0 * b_raw

    # One-time lane padding of the output dim for unmasked (lane-dense) stores.
    if lane_multiple:
        n_pad = _round_up(out_features, lane_multiple)
        if n_pad != out_features:
            w_k = jnp.pad(w_k, ((0, 0), (0, n_pad - out_features)))
            b_k = jnp.pad(b_k, ((0, 0), (0, n_pad - out_features)))

    return (w_k, b_k), (w_raw, b_raw)


if __name__ == "__main__":
    key = jax.random.PRNGKey(0)
    kx, kp = jax.random.split(key)

    in_features = 32
    out_features = 32
    batch = 128
    omega_0 = 30.0
    is_first = True

    x = jax.random.uniform(kx, (batch, in_features), jnp.float32,
                           minval=-1.0, maxval=1.0)
    (w_k, b_k), (w_raw, b_raw) = init_linear_sine_params(
        kp, in_features, out_features, is_first=is_first, omega_0=omega_0)

    y = linear_sine(x, w_k, b_k, out_features=out_features)
    y = jax.block_until_ready(y)
    assert y.shape == (batch, out_features)

    # (a) reference on the exact same (omega-folded) numerics path, tight tolerance
    y_ref = jnp.sin(x @ w_k[:, :out_features] + b_k[:, :out_features])
    assert jnp.allclose(y, y_ref, atol=2e-5, rtol=1e-5), \
        float(jnp.max(jnp.abs(y - y_ref)))
    # (b) literal PyTorch-module form: sin(omega_0 * (x @ W^T + bias))
    y_mod = jnp.sin(omega_0 * (x @ w_raw + b_raw))
    assert jnp.allclose(y, y_mod, atol=1e-4, rtol=1e-4), \
        float(jnp.max(jnp.abs(y - y_mod)))

    print("KERNEL_OK")
</pallas_src>

<mosaic_0001>
module attributes {stable_mosaic.version = 11 : i64} {
  func.func @_linear_sine_kernel(%arg0: i32, %arg1: i32, %arg2: i32, %arg3: memref<128x32xf32, #tpu.memory_space<vmem>>, %arg4: memref<32x128xf32, #tpu.memory_space<vmem>>, %arg5: memref<1x128xf32, #tpu.memory_space<vmem>>, %arg6: memref<128x128xf32, #tpu.memory_space<vmem>>, %arg7: memref<128x128xf32, #tpu.memory_space<vmem>>) attributes {dimension_semantics = [#tpu.dimension_semantics<parallel>, #tpu.dimension_semantics<parallel>, #tpu.dimension_semantics<arbitrary>], iteration_bounds = array<i64: 1, 1, 1>, scalar_prefetch = 0 : i64, scratch_operands = 1 : i64, tpu.core_type = #tpu.core_type<tc>, window_params = [{transform_indices = @transform_0, window_bounds = array<i64: 128, 32>}, {transform_indices = @transform_1, window_bounds = array<i64: 32, 128>}, {transform_indices = @transform_2, window_bounds = array<i64: 1, 128>}, {transform_indices = @transform_3, window_bounds = array<i64: 128, 128>}]} {
    %c0_i32 = arith.constant 0 : i32
    %0 = arith.cmpi eq, %arg2, %c0_i32 : i32
    %1 = arith.extui %0 : i1 to i32
    %c0_i32_0 = arith.constant 0 : i32
    %2 = arith.cmpi ne, %1, %c0_i32_0 : i32
    scf.if %2 {
      %cst_10 = arith.constant 0.000000e+00 : f32
      %12 = vector.broadcast %cst_10 : f32 to vector<128x128xf32>
      %c0_11 = arith.constant 0 : index
      %c0_12 = arith.constant 0 : index
      %13 = vector.load %arg7[%c0_11, %c0_12] : memref<128x128xf32, #tpu.memory_space<vmem>>, vector<128x128xf32>
      tpu.vector_store %arg7[%c0_11, %c0_12], %12 {strides = array<i32>} : memref<128x128xf32, #tpu.memory_space<vmem>>, vector<128x128xf32>,
    } else {
    }
    %c0 = arith.constant 0 : index
    %c0_1 = arith.constant 0 : index
    %3 = vector.load %arg7[%c0, %c0_1] : memref<128x128xf32, #tpu.memory_space<vmem>>, vector<128x128xf32>
    %c0_2 = arith.constant 0 : index
    %c0_3 = arith.constant 0 : index
    %4 = vector.load %arg3[%c0_2, %c0_3] : memref<128x32xf32, #tpu.memory_space<vmem>>, vector<128x32xf32>
    %c0_4 = arith.constant 0 : index
    %c0_5 = arith.constant 0 : index
    %5 = vector.load %arg4[%c0_4, %c0_5] : memref<32x128xf32, #tpu.memory_space<vmem>>, vector<32x128xf32>
    %cst = arith.constant dense<0.000000e+00> : vector<128x128xf32>
    %6 = tpu.matmul %4, %5, %cst {dimension_numbers = #tpu.dot_dimension_numbers<[1], [0], [0], [1], [0, 0, 1, 1], [], []>} : vector<128x32xf32>, vector<32x128xf32>, vector<128x128xf32> -> vector<128x128xf32>
    %7 = arith.addf %3, %6 : vector<128x128xf32>
    %c0_6 = arith.constant 0 : index
    %c0_7 = arith.constant 0 : index
    %8 = vector.load %arg7[%c0_6, %c0_7] : memref<128x128xf32, #tpu.memory_space<vmem>>, vector<128x128xf32>
    tpu.vector_store %arg7[%c0_6, %c0_7], %7 {strides = array<i32>} : memref<128x128xf32, #tpu.memory_space<vmem>>, vector<128x128xf32>,
    %c0_i32_8 = arith.constant 0 : i32
    %9 = arith.cmpi eq, %arg2, %c0_i32_8 : i32
    %10 = arith.extui %9 : i1 to i32
    %c0_i32_9 = arith.constant 0 : i32
    %11 = arith.cmpi ne, %10, %c0_i32_9 : i32
    scf.if %11 {
      %c0_10 = arith.constant 0 : index
      %c0_11 = arith.constant 0 : index
      %12 = vector.load %arg7[%c0_10, %c0_11] : memref<128x128xf32, #tpu.memory_space<vmem>>, vector<128x128xf32>
      %c0_12 = arith.constant 0 : index
      %c0_13 = arith.constant 0 : index
      %13 = vector.load %arg5[%c0_12, %c0_13] : memref<1x128xf32, #tpu.memory_space<vmem>>, vector<1x128xf32>
      %14 = vector.broadcast %13 : vector<1x128xf32> to vector<128x128xf32>
      %15 = arith.addf %12, %14 : vector<128x128xf32>
      %16 = math.sin %15 : vector<128x128xf32>
      %c0_14 = arith.constant 0 : index
      %c0_15 = arith.constant 0 : index
      %17 = vector.load %arg6[%c0_14, %c0_15] : memref<128x128xf32, #tpu.memory_space<vmem>>, vector<128x128xf32>
      tpu.vector_store %arg6[%c0_14, %c0_15], %16 {strides = array<i32>} : memref<128x128xf32, #tpu.memory_space<vmem>>, vector<128x128xf32>,
    } else {
    }
    return
  }
  func.func @transform_0(%arg0: i32, %arg1: i32, %arg2: i32) -> (i32, i32) {
    %c0_i32 = arith.constant 0 : i32
    return %arg0, %arg2 : i32, i32
  }
  func.func @transform_1(%arg0: i32, %arg1: i32, %arg2: i32) -> (i32, i32) {
    %c0_i32 = arith.constant 0 : i32
    return %arg2, %arg1 : i32, i32
  }
  func.func @transform_2(%arg0: i32, %arg1: i32, %arg2: i32) -> (i32, i32) {
    %c0_i32 = arith.constant 0 : i32
    %c0_i32_0 = arith.constant 0 : i32
    return %c0_i32, %arg1 : i32, i32
  }
  func.func @transform_3(%arg0: i32, %arg1: i32, %arg2: i32) -> (i32, i32) {
    %c0_i32 = arith.constant 0 : i32
    return %arg0, %arg1 : i32, i32
  }
}

</mosaic_0001>

<llo_original>
// kernel: tpu_custom_call.1
$region0: #{tpu_custom_call.1}
  #allocation0 [shape = 'u32[]', space=smem, size = 0x4, offset = 0x4, fixed_abs, tag = 'smem constant byte address 0x4 - core index']
  #allocation1 [shape = 'u32[144,128]{1,0:T(1,128)}', space=vmem, size = 0x12000, scoped, tag = 'internal scratch']
  #allocation2 [shape = 'f32[128,128]{1,0:T(8,128)}', space=vmem, size = 0x10000, scoped, tag = 'scratch operand']
  %s0 = inlined_call_operand.hbm [shape: f32[128,32], index: 0, kind: input, shape index: {}]
  %s1 = inlined_call_operand.hbm [shape: f32[32,128], index: 1, kind: input, shape index: {}]
  %s2 = inlined_call_operand.hbm [shape: f32[1,128], index: 2, kind: input, shape index: {}]
  %s3 = inlined_call_operand.hbm [shape: f32[128,128], index: 3, kind: output, shape index: {}]
  %s4 = sld [smem:[#allocation0]]
  $region42: #{tpu_custom_call.1} parent=0
    _
  %s6 = ssub.s32 1, %s4
  %s7 = scalar_select 0, %s6, %s4
  $region1: #{tpu_custom_call.1} parent=0
    #allocation3 [shape = 'u8[65536]{0}', space=vmem, size = 0x10000, scoped, tag = 'input window, operand 0, single buffered']
    #allocation4 [shape = 's32[1]{0}', space=sflag, size = 0x4, scoped, tag = 'scoped memory for tpu_custom_call.1']
    #allocation5 [shape = 's32[1]{0}', space=sflag, size = 0x4, scoped, tag = 'scoped memory for tpu_custom_call.1']
    #allocation6 [shape = 'u8[16384]{0}', space=vmem, size = 0x4000, scoped, tag = 'input window, operand 1, single buffered']
    #allocation7 [shape = 's32[1]{0}', space=sflag, size = 0x4, scoped, tag = 'scoped memory for tpu_custom_call.1']
    #allocation8 [shape = 'u8[512]{0}', space=vmem, size = 0x400, scoped, tag = 'input window, operand 2, single buffered']
    #allocation9 [shape = 'u8[65536]{0}', space=vmem, size = 0x10000, scoped, tag = 'output window, operand 0, single buffered']
    %8 = vsyncpa [#allocation4], 0
    %9 = vsyncpa [#allocation7], 0
    %10 = vsyncpa [#allocation5], 0
    // Predicated region
    $region2: #{tpu_custom_call.1} parent=1 // pred_check
      _
    $region3: #{tpu_custom_call.1} parent=1 // pred_check_branch
      %12 = sbr.rel (0) target = $region5
    $region4: #{tpu_custom_call.1} parent=1 // pred_region
      %s14 = ssub.s32 2048, 2048
      %15 = vsyncadd [#allocation4], %s14
      %s16 = sshll.u32 [#allocation3], 4
      %s17 = int_to_ptr.vmem [resolvable:$true] %s16
      %22 = dma.hbm_to_vmem [thread:$0]  %s0, 2048, %s17, [#allocation4], 128, 128, 8
    $region5: #{tpu_custom_call.1} parent=1 // pred_fallthru
      _
    // Predicated region
    $region6: #{tpu_custom_call.1} parent=1 // pred_check
      _
    $region7: #{tpu_custom_call.1} parent=1 // pred_check_branch
      %24 = sbr.rel (0) target = $region9
    $region8: #{tpu_custom_call.1} parent=1 // pred_region
      %s26 = ssub.s32 512, 512
      %27 = vsyncadd [#allocation7], %s26
      %s28 = sshll.u32 [#allocation6], 4
      %s29 = int_to_ptr.vmem [resolvable:$true] %s28
      %34 = dma.hbm_to_vmem [thread:$0]  %s1, 512, %s29, [#allocation7], 128, 128, 8
    $region9: #{tpu_custom_call.1} parent=1 // pred_fallthru
      _
    // Predicated region
    $region10: #{tpu_custom_call.1} parent=1 // pred_check
      _
    $region11: #{tpu_custom_call.1} parent=1 // pred_check_branch
      %36 = sbr.rel (0) target = $region13
    $region12: #{tpu_custom_call.1} parent=1 // pred_region
      %s38 = ssub.s32 16, 16
      %39 = vsyncadd [#allocation7], %s38
      %s41 = sshll.u32 [#allocation8], 4
      %s42 = int_to_ptr.vmem [resolvable:$true] %s41
      %44 = dma.hbm_to_vmem [thread:$0]  %s2, 16, %s42, [#allocation7]
    $region13: #{tpu_custom_call.1} parent=1 // pred_fallthru
      _
    // Predicated region
    $region14: #{tpu_custom_call.1} parent=1 // pred_check
      _
    $region15: #{tpu_custom_call.1} parent=1 // pred_check_branch
      %46 = sbr.rel (0) target = $region17
    $region16: #{tpu_custom_call.1} parent=1 // pred_region
      %47 = dma.done [#allocation4], 2048
    $region17: #{tpu_custom_call.1} parent=1 // pred_fallthru
      _
    // Predicated region
    $region18: #{tpu_custom_call.1} parent=1 // pred_check
      _
    $region19: #{tpu_custom_call.1} parent=1 // pred_check_branch
      %49 = sbr.rel (0) target = $region21
    $region20: #{tpu_custom_call.1} parent=1 // pred_region
      %50 = dma.done [#allocation7], 512
    $region21: #{tpu_custom_call.1} parent=1 // pred_fallthru
      _
    // Predicated region
    $region22: #{tpu_custom_call.1} parent=1 // pred_check
      _
    $region23: #{tpu_custom_call.1} parent=1 // pred_check_branch
      %52 = sbr.rel (0) target = $region25
    $region24: #{tpu_custom_call.1} parent=1 // pred_region
      %53 = dma.done [#allocation7], 16
    $region25: #{tpu_custom_call.1} parent=1 // pred_fallthru
      _
    %p54 = scmp.eq.s32.totalorder 0, 0
    // Predicated region
    $region26: #{tpu_custom_call.1} parent=1 // pred_check
      %p55 = pneg %p54
    $region27: #{tpu_custom_call.1} parent=1 // pred_check_branch
      %57 = sbr.rel (%p55) target = $region29
    $region28: #{tpu_custom_call.1} parent=1 // pred_region
      %58 = vst [vmem:[#allocation2] sm:$0xff] 0.0
      %59 = vst [vmem:[#allocation2 + $0x8] sm:$0xff] 0.0
      %60 = vst [vmem:[#allocation2 + $0x10] sm:$0xff] 0.0
      %61 = vst [vmem:[#allocation2 + $0x18] sm:$0xff] 0.0
      %62 = vst [vmem:[#allocation2 + $0x20] sm:$0xff] 0.0
      %63 = vst [vmem:[#allocation2 + $0x28] sm:$0xff] 0.0
      %64 = vst [vmem:[#allocation2 + $0x30] sm:$0xff] 0.0
      %65 = vst [vmem:[#allocation2 + $0x38] sm:$0xff] 0.0
      %66 = vst [vmem:[#allocation2 + $0x40] sm:$0xff] 0.0
      %67 = vst [vmem:[#allocation2 + $0x48] sm:$0xff] 0.0
      %68 = vst [vmem:[#allocation2 + $0x50] sm:$0xff] 0.0
      %69 = vst [vmem:[#allocation2 + $0x58] sm:$0xff] 0.0
      %70 = vst [vmem:[#allocation2 + $0x60] sm:$0xff] 0.0
      %71 = vst [vmem:[#allocation2 + $0x68] sm:$0xff] 0.0
      %72 = vst [vmem:[#allocation2 + $0x70] sm:$0xff] 0.0
      %73 = vst [vmem:[#allocation2 + $0x78] sm:$0xff] 0.0
    $region29: #{tpu_custom_call.1} parent=1 // pred_fallthru
      _
    %v74 = vld [vmem:[#allocation2] sm:$0xff]
    %v75 = vld [vmem:[#allocation2 + $0x8] sm:$0xff]
    %v76 = vld [vmem:[#allocation2 + $0x10] sm:$0xff]
    %v77 = vld [vmem:[#allocation2 + $0x18] sm:$0xff]
    %v78 = vld [vmem:[#allocation2 + $0x20] sm:$0xff]
    %v79 = vld [vmem:[#allocation2 + $0x28] sm:$0xff]
    %v80 = vld [vmem:[#allocation2 + $0x30] sm:$0xff]
    %v81 = vld [vmem:[#allocation2 + $0x38] sm:$0xff]
    %v82 = vld [vmem:[#allocation2 + $0x40] sm:$0xff]
    %v83 = vld [vmem:[#allocation2 + $0x48] sm:$0xff]
    %v84 = vld [vmem:[#allocation2 + $0x50] sm:$0xff]
    %v85 = vld [vmem:[#allocation2 + $0x58] sm:$0xff]
    %v86 = vld [vmem:[#allocation2 + $0x60] sm:$0xff]
    %v87 = vld [vmem:[#allocation2 + $0x68] sm:$0xff]
    %v88 = vld [vmem:[#allocation2 + $0x70] sm:$0xff]
    %v89 = vld [vmem:[#allocation2 + $0x78] sm:$0xff]
    %v90 = vld [vmem:[#allocation3] sm:$0xff]
    %v91 = vld [vmem:[#allocation3 + $0x8] sm:$0xff]
    %v92 = vld [vmem:[#allocation3 + $0x10] sm:$0xff]
    %v93 = vld [vmem:[#allocation3 + $0x18] sm:$0xff]
    %v94 = vld [vmem:[#allocation3 + $0x20] sm:$0xff]
    %v95 = vld [vmem:[#allocation3 + $0x28] sm:$0xff]
    %v96 = vld [vmem:[#allocation3 + $0x30] sm:$0xff]
    %v97 = vld [vmem:[#allocation3 + $0x38] sm:$0xff]
    %v98 = vld [vmem:[#allocation3 + $0x40] sm:$0xff]
    %v99 = vld [vmem:[#allocation3 + $0x48] sm:$0xff]
    %v100 = vld [vmem:[#allocation3 + $0x50] sm:$0xff]
    %v101 = vld [vmem:[#allocation3 + $0x58] sm:$0xff]
    %v102 = vld [vmem:[#allocation3 + $0x60] sm:$0xff]
    %v103 = vld [vmem:[#allocation3 + $0x68] sm:$0xff]
    %v104 = vld [vmem:[#allocation3 + $0x70] sm:$0xff]
    %v105 = vld [vmem:[#allocation3 + $0x78] sm:$0xff]
    %v106 = vld [vmem:[#allocation6] sm:$0xff]
    %v107 = vld [vmem:[#allocation6 + $0x8] sm:$0xff]
    %v108 = vld [vmem:[#allocation6 + $0x10] sm:$0xff]
    %v109 = vld [vmem:[#allocation6 + $0x18] sm:$0xff]
    %vm110 = vcmask 261120
    %v112 = vsel %vm110, %v90, 0
    %v115 = vsel %vm110, %v91, 0
    %v118 = vsel %vm110, %v92, 0
    %v121 = vsel %vm110, %v93, 0
    %v124 = vsel %vm110, %v94, 0
    %v127 = vsel %vm110, %v95, 0
    %v130 = vsel %vm110, %v96, 0
    %v133 = vsel %vm110, %v97, 0
    %v136 = vsel %vm110, %v98, 0
    %v139 = vsel %vm110, %v99, 0
    %v142 = vsel %vm110, %v100, 0
    %v145 = vsel %vm110, %v101, 0
    %v148 = vsel %vm110, %v102, 0
    %v151 = vsel %vm110, %v103, 0
    %v154 = vsel %vm110, %v104, 0
    %v157 = vsel %vm110, %v105, 0
    %159 = vmatprep.subr.mxu0 0.0
    %160 = vmatpush1.msra.mxu0 %v106
    %161 = vmatprep.subr.mxu0 0.0
    %162 = vmatpush1.msra.mxu0 %v107
    %163 = vmatprep.subr.mxu0 0.0
    %164 = vmatpush1.msra.mxu0 %v108
    %165 = vmatprep.subr.mxu0 0.0
    %166 = vmatpush1.msra.mxu0 %v109
    %167 = vmatprep.subr.mxu0 0.0
    %168 = vmatpush1.msra.mxu0 0.0
    %169 = vmatprep.subr.mxu0 0.0
    %170 = vmatpush1.msra.mxu0 0.0
    %171 = vmatprep.subr.mxu0 0.0
    %172 = vmatpush1.msra.mxu0 0.0
    %173 = vmatprep.subr.mxu0 0.0
    %174 = vmatpush1.msra.mxu0 0.0
    %175 = vmatprep.subr.mxu0 0.0
    %176 = vmatpush1.msra.mxu0 0.0
    %177 = vmatprep.subr.mxu0 0.0
    %178 = vmatpush1.msra.mxu0 0.0
    %179 = vmatprep.subr.mxu0 0.0
    %180 = vmatpush1.msra.mxu0 0.0
    %181 = vmatprep.subr.mxu0 0.0
    %182 = vmatpush1.msra.mxu0 0.0
    %183 = vmatprep.subr.mxu0 0.0
    %184 = vmatpush1.msra.mxu0 0.0
    %185 = vmatprep.subr.mxu0 0.0
    %186 = vmatpush1.msra.mxu0 0.0
    %187 = vmatprep.subr.mxu0 0.0
    %188 = vmatpush1.msra.mxu0 0.0
    %189 = vmatprep.subr.mxu0 0.0
    %190 = vmatpush1.msra.mxu0 0.0
    %191 = vmatprep.subr.mxu0 0.0
    %192 = vmatpush1.msra.mxu0 0.0
    %193 = vmatprep.subr.mxu0 0.0
    %194 = vmatpush1.msra.mxu0 0.0
    %195 = vmatprep.subr.mxu0 0.0
    %196 = vmatpush1.msra.mxu0 0.0
    %197 = vmatprep.subr.mxu0 0.0
    %198 = vmatpush1.msra.mxu0 0.0
    %199 = vmatprep.subr.mxu0 0.0
    %200 = vmatpush1.msra.mxu0 0.0
    %201 = vmatprep.subr.mxu0 0.0
    %202 = vmatpush1.msra.mxu0 0.0
    %203 = vmatprep.subr.mxu0 0.0
    %204 = vmatpush1.msra.mxu0 0.0
    %205 = vmatprep.subr.mxu0 0.0
    %206 = vmatpush1.msra.mxu0 0.0
    %207 = vmatprep.subr.mxu0 0.0
    %208 = vmatpush1.msra.mxu0 0.0
    %209 = vmatprep.subr.mxu0 0.0
    %210 = vmatpush1.msra.mxu0 0.0
    %211 = vmatprep.subr.mxu0 0.0
    %212 = vmatpush1.msra.mxu0 0.0
    %213 = vmatprep.subr.mxu0 0.0
    %214 = vmatpush1.msra.mxu0 0.0
    %215 = vmatprep.subr.mxu0 0.0
    %216 = vmatpush1.msra.mxu0 0.0
    %217 = vmatprep.subr.mxu0 0.0
    %218 = vmatpush1.msra.mxu0 0.0
    %219 = vmatprep.subr.mxu0 0.0
    %220 = vmatpush1.msra.mxu0 0.0
    %221 = vmatprep.subr.mxu0 0.0
    %222 = vmatpush1.msra.mxu0 0.0
    %223 = vmatprep.mubr.f32.mxu0 0.0
    %224 = vmatmul.mubr.f32.gmra.mrb[0].mxu0 %v112
    %v225 = vpop.f32.mrb[0].mxu0
    %v226 = vadd.f32 0.0, %v225
    %v227 = vpop.f32.mrb[0].mxu0
    %228 = vmatprep.mubr.f32.mxu0 0.0
    %229 = vmatmul.mubr.f32.gmra.mrb[0].mxu0 %v115
    %v230 = vpop.f32.mrb[0].mxu0
    %v231 = vadd.f32 0.0, %v230
    %v232 = vpop.f32.mrb[0].mxu0
    %233 = vmatprep.mubr.f32.mxu0 0.0
    %234 = vmatmul.mubr.f32.gmra.mrb[0].mxu0 %v118
    %v235 = vpop.f32.mrb[0].mxu0
    %v236 = vadd.f32 0.0, %v235
    %v237 = vpop.f32.mrb[0].mxu0
    %238 = vmatprep.mubr.f32.mxu0 0.0
    %239 = vmatmul.mubr.f32.gmra.mrb[0].mxu0 %v121
    %v240 = vpop.f32.mrb[0].mxu0
    %v241 = vadd.f32 0.0, %v240
    %v242 = vpop.f32.mrb[0].mxu0
    %243 = vmatprep.mubr.f32.mxu0 0.0
    %244 = vmatmul.mubr.f32.gmra.mrb[0].mxu0 %v124
    %v245 = vpop.f32.mrb[0].mxu0
    %v246 = vadd.f32 0.0, %v245
    %v247 = vpop.f32.mrb[0].mxu0
    %248 = vmatprep.mubr.f32.mxu0 0.0
    %249 = vmatmul.mubr.f32.gmra.mrb[0].mxu0 %v127
    %v250 = vpop.f32.mrb[0].mxu0
    %v251 = vadd.f32 0.0, %v250
    %v252 = vpop.f32.mrb[0].mxu0
    %253 = vmatprep.mubr.f32.mxu0 0.0
    %254 = vmatmul.mubr.f32.gmra.mrb[0].mxu0 %v130
    %v255 = vpop.f32.mrb[0].mxu0
    %v256 = vadd.f32 0.0, %v255
    %v257 = vpop.f32.mrb[0].mxu0
    %258 = vmatprep.mubr.f32.mxu0 0.0
    %259 = vmatmul.mubr.f32.gmra.mrb[0].mxu0 %v133
    %v260 = vpop.f32.mrb[0].mxu0
    %v261 = vadd.f32 0.0, %v260
    %v262 = vpop.f32.mrb[0].mxu0
    %263 = vmatprep.mubr.f32.mxu0 0.0
    %264 = vmatmul.mubr.f32.gmra.mrb[0].mxu0 %v136
    %v265 = vpop.f32.mrb[0].mxu0
    %v266 = vadd.f32 0.0, %v265
    %v267 = vpop.f32.mrb[0].mxu0
    %268 = vmatprep.mubr.f32.mxu0 0.0
    %269 = vmatmul.mubr.f32.gmra.mrb[0].mxu0 %v139
    %v270 = vpop.f32.mrb[0].mxu0
    %v271 = vadd.f32 0.0, %v270
    %v272 = vpop.f32.mrb[0].mxu0
    %273 = vmatprep.mubr.f32.mxu0 0.0
    %274 = vmatmul.mubr.f32.gmra.mrb[0].mxu0 %v142
    %v275 = vpop.f32.mrb[0].mxu0
    %v276 = vadd.f32 0.0, %v275
    %v277 = vpop.f32.mrb[0].mxu0
    %278 = vmatprep.mubr.f32.mxu0 0.0
    %279 = vmatmul.mubr.f32.gmra.mrb[0].mxu0 %v145
    %v280 = vpop.f32.mrb[0].mxu0
    %v281 = vadd.f32 0.0, %v280
    %v282 = vpop.f32.mrb[0].mxu0
    %283 = vmatprep.mubr.f32.mxu0 0.0
    %284 = vmatmul.mubr.f32.gmra.mrb[0].mxu0 %v148
    %v285 = vpop.f32.mrb[0].mxu0
    %v286 = vadd.f32 0.0, %v285
    %v287 = vpop.f32.mrb[0].mxu0
    %288 = vmatprep.mubr.f32.mxu0 0.0
    %289 = vmatmul.mubr.f32.gmra.mrb[0].mxu0 %v151
    %v290 = vpop.f32.mrb[0].mxu0
    %v291 = vadd.f32 0.0, %v290
    %v292 = vpop.f32.mrb[0].mxu0
    %293 = vmatprep.mubr.f32.mxu0 0.0
    %294 = vmatmul.mubr.f32.gmra.mrb[0].mxu0 %v154
    %v295 = vpop.f32.mrb[0].mxu0
    %v296 = vadd.f32 0.0, %v295
    %v297 = vpop.f32.mrb[0].mxu0
    %298 = vmatprep.mubr.f32.mxu0 0.0
    %299 = vmatmul.mubr.f32.gmra.mrb[0].mxu0 %v157
    %v300 = vpop.f32.mrb[0].mxu0
    %v301 = vadd.f32 0.0, %v300
    %v302 = vpop.f32.mrb[0].mxu0
    %303 = vdwg.mxu0
    %v304 = vadd.f32 %v74, %v226
    %v305 = vadd.f32 %v75, %v231
    %v306 = vadd.f32 %v76, %v236
    %v307 = vadd.f32 %v77, %v241
    %v308 = vadd.f32 %v78, %v246
    %v309 = vadd.f32 %v79, %v251
    %v310 = vadd.f32 %v80, %v256
    %v311 = vadd.f32 %v81, %v261
    %v312 = vadd.f32 %v82, %v266
    %v313 = vadd.f32 %v83, %v271
    %v314 = vadd.f32 %v84, %v276
    %v315 = vadd.f32 %v85, %v281
    %v316 = vadd.f32 %v86, %v286
    %v317 = vadd.f32 %v87, %v291
    %v318 = vadd.f32 %v88, %v296
    %v319 = vadd.f32 %v89, %v301
    %320 = vst [vmem:[#allocation2] sm:$0xff] %v304
    %321 = vst [vmem:[#allocation2 + $0x8] sm:$0xff] %v305
    %322 = vst [vmem:[#allocation2 + $0x10] sm:$0xff] %v306
    %323 = vst [vmem:[#allocation2 + $0x18] sm:$0xff] %v307
    %324 = vst [vmem:[#allocation2 + $0x20] sm:$0xff] %v308
    %325 = vst [vmem:[#allocation2 + $0x28] sm:$0xff] %v309
    %326 = vst [vmem:[#allocation2 + $0x30] sm:$0xff] %v310
    %327 = vst [vmem:[#allocation2 + $0x38] sm:$0xff] %v311
    %328 = vst [vmem:[#allocation2 + $0x40] sm:$0xff] %v312
    %329 = vst [vmem:[#allocation2 + $0x48] sm:$0xff] %v313
    %330 = vst [vmem:[#allocation2 + $0x50] sm:$0xff] %v314
    %331 = vst [vmem:[#allocation2 + $0x58] sm:$0xff] %v315
    %332 = vst [vmem:[#allocation2 + $0x60] sm:$0xff] %v316
    %333 = vst [vmem:[#allocation2 + $0x68] sm:$0xff] %v317
    %334 = vst [vmem:[#allocation2 + $0x70] sm:$0xff] %v318
    %335 = vst [vmem:[#allocation2 + $0x78] sm:$0xff] %v319
    // Predicated region
    $region30: #{tpu_custom_call.1} parent=1 // pred_check
      %p336 = pneg %p54
    $region31: #{tpu_custom_call.1} parent=1 // pred_check_branch
      %338 = sbr.rel (%p336) target = $region33
    $region32: #{tpu_custom_call.1} parent=1 // pred_region
      %v339 = vld [vmem:[#allocation2] sm:$0xff]
      %v340 = vld [vmem:[#allocation2 + $0x8] sm:$0xff]
      %v341 = vld [vmem:[#allocation2 + $0x10] sm:$0xff]
      %v342 = vld [vmem:[#allocation2 + $0x18] sm:$0xff]
      %v343 = vld [vmem:[#allocation2 + $0x20] sm:$0xff]
      %v344 = vld [vmem:[#allocation2 + $0x28] sm:$0xff]
      %v345 = vld [vmem:[#allocation2 + $0x30] sm:$0xff]
      %v346 = vld [vmem:[#allocation2 + $0x38] sm:$0xff]
      %v347 = vld [vmem:[#allocation2 + $0x40] sm:$0xff]
      %v348 = vld [vmem:[#allocation2 + $0x48] sm:$0xff]
      %v349 = vld [vmem:[#allocation2 + $0x50] sm:$0xff]
      %v350 = vld [vmem:[#allocation2 + $0x58] sm:$0xff]
      %v351 = vld [vmem:[#allocation2 + $0x60] sm:$0xff]
      %v352 = vld [vmem:[#allocation2 + $0x68] sm:$0xff]
      %v353 = vld [vmem:[#allocation2 + $0x70] sm:$0xff]
      %v354 = vld [vmem:[#allocation2 + $0x78] sm:$0xff]
      %v355 = vld [vmem:[#allocation8] sm:$0x1]
      %v357 = vlaneseq
      %v358 = vshrl.u32 %v357, 7
      %v359 = vsub.s32 0, %v358
      %v360 = vrot.slane %v355, %v359
      %v362 = vadd.f32 %v339, %v360
      %v363 = vadd.f32 %v340, %v360
      %v364 = vadd.f32 %v341, %v360
      %v365 = vadd.f32 %v342, %v360
      %v366 = vadd.f32 %v343, %v360
      %v367 = vadd.f32 %v344, %v360
      %v368 = vadd.f32 %v345, %v360
      %v369 = vadd.f32 %v346, %v360
      %v370 = vadd.f32 %v347, %v360
      %v371 = vadd.f32 %v348, %v360
      %v372 = vadd.f32 %v349, %v360
      %v373 = vadd.f32 %v350, %v360
      %v374 = vadd.f32 %v351, %v360
      %v375 = vadd.f32 %v352, %v360
      %v376 = vadd.f32 %v353, %v360
      %v377 = vadd.f32 %v354, %v360
      %v378 = vand.u32 2147483647, %v362
      %vm379 = vcmp.le.f32.partialorder %v378, 0.7853982
      %vm380 = vcmp.lt.s32.totalorder %v362, 0
      %v381 = vand.u32 %v362, 2139095040
      %v382 = vshrl.u32 %v381, 23
      %v383 = vsub.s32 %v382, 127
      %v384 = vand.u32 2147483647, %v362
      %v385 = vand.u32 %v384, 8388607
      %v386 = vor.u32 %v385, 8388608
      %v387 = vsub.s32 0, %v386
      %v388 = vadd.s32 %v383, 1
      %vm389 = vcmp.gt.s32.totalorder %v388, 0
      %v390 = vsel %vm389, %v388, 0
      %v391 = vshrl.u32 %v390, 5
      %v392 = vand.u32 %v390, 31
      %v393 = vsub.s32 32, %v392
      %v394 = vshrl.u32 683565275, %v393
      %v395 = vshll.u32 683565275, %v392
      %v396 = vshrl.u32 2475754826, %v393
      %v397 = vor.u32 %v395, %v396
      %v398 = vshll.u32 2475754826, %v392
      %v399 = vshrl.u32 2131351028, %v393
      %v400 = vor.u32 %v398, %v399
      %v401 = vshll.u32 2131351028, %v392
      %v402 = vshrl.u32 2102212464, %v393
      %v403 = vor.u32 %v401, %v402
      %v404 = vshll.u32 2102212464, %v392
      %v405 = vshrl.u32 920167782, %v393
      %v406 = vor.u32 %v404, %v405
      %v407 = vshll.u32 920167782, %v392
      %v408 = vshrl.u32 1326507024, %v393
      %v409 = vor.u32 %v407, %v408
      %vm410 = vcmp.lt.s32.totalorder %v391, 1
      %vm411 = vcmp.lt.s32.totalorder %v391, 2
      %vm412 = vcmp.lt.s32.totalorder %v391, 3
      %vm413 = vcmp.lt.s32.totalorder %v391, 4
      %v414 = vsel %vm410, %v394, %v397
      %v415 = vsel %vm413, %v403, 2102212464
      %v416 = vsel %vm412, %v400, %v415
      %v417 = vsel %vm411, %v414, %v416
      %v418 = vsel %vm410, %v397, %v400
      %v419 = vsel %vm413, %v406, 920167782
      %v420 = vsel %vm412, %v403, %v419
      %v421 = vsel %vm411, %v418, %v420
      %v422 = vsel %vm410, %v400, %v403
      %v423 = vsel %vm413, %v409, 1326507024
      %v424 = vsel %vm412, %v406, %v423
      %v425 = vsel %vm411, %v422, %v424
      %v426 = vshll.u32 %v386, 8
      %v427 = vmul.u32.u64.compose %v426, %v425
      %v428 = vextract.low.u32 %v427
      %v429 = vextract.high.u32 %v427
      %v430 = vmul.u32.u64.compose %v426, %v421
      %v431 = vextract.low.u32 %v430
      %v432 = vextract.high.u32 %v430
      %v433 = vmul.u32 %v426, %v417
      %v434 = vadd.s32 %v429, %v431
      %vm435 = vc.u32 %v429, %v431
      %v436 = vadd.s32 %v432, 1
      %v437 = vsel %vm435, %v436, %v432
      %v438 = vadd.s32 %v433, %v437
      %v439 = vadd.s32 %v438, 536870912
      %v440 = vshrl.u32 %v439, 30
      %v441 = vshll.u32 %v440, 30
      %v442 = vsub.s32 %v438, %v441
      %vm443 = vcmp.lt.s32.totalorder %v442, 0
      %v444 = vsub.s32 0, %v442
      %v445 = vsel %vm443, %v444, %v442
      %v446 = vclz %v445
      %v447 = vsub.s32 %v446, 2
      %vm448 = vcmp.gt.s32.totalorder 0, %v447
      %v449 = vsel %vm448, 0, %v447
      %v450 = vsub.s32 32, %v449
      %v451 = vshll.u32 %v442, %v449
      %v452 = vshrl.u32 %v434, %v450
      %v453 = vor.u32 %v451, %v452
      %v454 = vsub.s32 4294967266, %v449
      %v455 = vadd.s32 %v454, 127
      %v456 = vshll.u32 %v455, 23
      %v457 = vor.u32 4788187, %v456
      %v458 = vand.u32 2147483647, %v457
      %v460 = vcvt.s32.f32 %v453
      %v461 = vmul.f32 %v460, %v458
      %v462 = vxor.u32 %v461, 2147483648
      %v463 = vsel %vm380, %v462, %v461
      %v464 = vsub.s32 4, %v440
      %v465 = vsel %vm380, %v464, %v440
      %v466 = vsel %vm379, %v362, %v463
      %v467 = vsel %vm379, 0, %v465
      %v468 = vcosq.f32.pop %v466
      %v469 = vsinq.f32.pop %v466
      %vm470 = vweird.f32 %v362
      %v471 = vadd.s32 %v467, 3
      %v472 = vand.u32 %v471, 3
      %vm473 = vcmp.lt.s32.totalorder %v472, 2
      %vm474 = vcmp.eq.s32.totalorder %v472, 0
      %v475 = vxor.u32 %v469, 2147483648
      %v476 = vsel %vm474, %v468, %v475
      %vm477 = vcmp.eq.s32.totalorder %v472, 2
      %v478 = vxor.u32 %v468, 2147483648
      %v479 = vsel %vm477, %v478, %v469
      %v480 = vsel %vm473, %v476, %v479
      %v481 = vsel %vm470, nan, %v480
      %v482 = vand.u32 2147483647, %v363
      %vm483 = vcmp.le.f32.partialorder %v482, 0.7853982
      %vm484 = vcmp.lt.s32.totalorder %v363, 0
      %v485 = vand.u32 %v363, 2139095040
      %v486 = vshrl.u32 %v485, 23
      %v487 = vsub.s32 %v486, 127
      %v488 = vand.u32 2147483647, %v363
      %v489 = vand.u32 %v488, 8388607
      %v490 = vor.u32 %v489, 8388608
      %v491 = vsub.s32 0, %v490
      %v492 = vadd.s32 %v487, 1
      %vm493 = vcmp.gt.s32.totalorder %v492, 0
      %v494 = vsel %vm493, %v492, 0
      %v495 = vshrl.u32 %v494, 5
      %v496 = vand.u32 %v494, 31
      %v497 = vsub.s32 32, %v496
      %v498 = vshrl.u32 683565275, %v497
      %v499 = vshll.u32 683565275, %v496
      %v500 = vshrl.u32 2475754826, %v497
      %v501 = vor.u32 %v499, %v500
      %v502 = vshll.u32 2475754826, %v496
      %v503 = vshrl.u32 2131351028, %v497
      %v504 = vor.u32 %v502, %v503
      %v505 = vshll.u32 2131351028, %v496
      %v506 = vshrl.u32 2102212464, %v497
      %v507 = vor.u32 %v505, %v506
      %v508 = vshll.u32 2102212464, %v496
      %v509 = vshrl.u32 920167782, %v497
      %v510 = vor.u32 %v508, %v509
      %v511 = vshll.u32 920167782, %v496
      %v512 = vshrl.u32 1326507024, %v497
      %v513 = vor.u32 %v511, %v512
      %vm514 = vcmp.lt.s32.totalorder %v495, 1
      %vm515 = vcmp.lt.s32.totalorder %v495, 2
      %vm516 = vcmp.lt.s32.totalorder %v495, 3
      %vm517 = vcmp.lt.s32.totalorder %v495, 4
      %v518 = vsel %vm514, %v498, %v501
      %v519 = vsel %vm517, %v507, 2102212464
      %v520 = vsel %vm516, %v504, %v519
      %v521 = vsel %vm515, %v518, %v520
      %v522 = vsel %vm514, %v501, %v504
      %v523 = vsel %vm517, %v510, 920167782
      %v524 = vsel %vm516, %v507, %v523
      %v525 = vsel %vm515, %v522, %v524
      %v526 = vsel %vm514, %v504, %v507
      %v527 = vsel %vm517, %v513, 1326507024
      %v528 = vsel %vm516, %v510, %v527
      %v529 = vsel %vm515, %v526, %v528
      %v530 = vshll.u32 %v490, 8
      %v531 = vmul.u32.u64.compose %v530, %v529
      %v532 = vextract.low.u32 %v531
      %v533 = vextract.high.u32 %v531
      %v534 = vmul.u32.u64.compose %v530, %v525
      %v535 = vextract.low.u32 %v534
      %v536 = vextract.high.u32 %v534
      %v537 = vmul.u32 %v530, %v521
      %v538 = vadd.s32 %v533, %v535
      %vm539 = vc.u32 %v533, %v535
      %v540 = vadd.s32 %v536, 1
      %v541 = vsel %vm539, %v540, %v536
      %v542 = vadd.s32 %v537, %v541
      %v543 = vadd.s32 %v542, 536870912
      %v544 = vshrl.u32 %v543, 30
      %v545 = vshll.u32 %v544, 30
      %v546 = vsub.s32 %v542, %v545
      %vm547 = vcmp.lt.s32.totalorder %v546, 0
      %v548 = vsub.s32 0, %v546
      %v549 = vsel %vm547, %v548, %v546
      %v550 = vclz %v549
      %v551 = vsub.s32 %v550, 2
      %vm552 = vcmp.gt.s32.totalorder 0, %v551
      %v553 = vsel %vm552, 0, %v551
      %v554 = vsub.s32 32, %v553
      %v555 = vshll.u32 %v546, %v553
      %v556 = vshrl.u32 %v538, %v554
      %v557 = vor.u32 %v555, %v556
      %v558 = vsub.s32 4294967266, %v553
      %v559 = vadd.s32 %v558, 127
      %v560 = vshll.u32 %v559, 23
      %v561 = vor.u32 4788187, %v560
      %v562 = vand.u32 2147483647, %v561
      %v564 = vcvt.s32.f32 %v557
      %v565 = vmul.f32 %v564, %v562
      %v566 = vxor.u32 %v565, 2147483648
      %v567 = vsel %vm484, %v566, %v565
      %v568 = vsub.s32 4, %v544
      %v569 = vsel %vm484, %v568, %v544
      %v570 = vsel %vm483, %v363, %v567
      %v571 = vsel %vm483, 0, %v569
      %v572 = vcosq.f32.pop %v570
      %v573 = vsinq.f32.pop %v570
      %vm574 = vweird.f32 %v363
      %v575 = vadd.s32 %v571, 3
      %v576 = vand.u32 %v575, 3
      %vm577 = vcmp.lt.s32.totalorder %v576, 2
      %vm578 = vcmp.eq.s32.totalorder %v576, 0
      %v579 = vxor.u32 %v573, 2147483648
      %v580 = vsel %vm578, %v572, %v579
      %vm581 = vcmp.eq.s32.totalorder %v576, 2
      %v582 = vxor.u32 %v572, 2147483648
      %v583 = vsel %vm581, %v582, %v573
      %v584 = vsel %vm577, %v580, %v583
      %v585 = vsel %vm574, nan, %v584
      %v586 = vand.u32 2147483647, %v364
      %vm587 = vcmp.le.f32.partialorder %v586, 0.7853982
      %vm588 = vcmp.lt.s32.totalorder %v364, 0
      %v589 = vand.u32 %v364, 2139095040
      %v590 = vshrl.u32 %v589, 23
      %v591 = vsub.s32 %v590, 127
      %v592 = vand.u32 2147483647, %v364
      %v593 = vand.u32 %v592, 8388607
      %v594 = vor.u32 %v593, 8388608
      %v595 = vsub.s32 0, %v594
      %v596 = vadd.s32 %v591, 1
      %vm597 = vcmp.gt.s32.totalorder %v596, 0
      %v598 = vsel %vm597, %v596, 0
      %v599 = vshrl.u32 %v598, 5
      %v600 = vand.u32 %v598, 31
      %v601 = vsub.s32 32, %v600
      %v602 = vshrl.u32 683565275, %v601
      %v603 = vshll.u32 683565275, %v600
      %v604 = vshrl.u32 2475754826, %v601
      %v605 = vor.u32 %v603, %v604
      %v606 = vshll.u32 2475754826, %v600
      %v607 = vshrl.u32 2131351028, %v601
      %v608 = vor.u32 %v606, %v607
      %v609 = vshll.u32 2131351028, %v600
      %v610 = vshrl.u32 2102212464, %v601
      %v611 = vor.u32 %v609, %v610
      %v612 = vshll.u32 2102212464, %v600
      %v613 = vshrl.u32 920167782, %v601
      %v614 = vor.u32 %v612, %v613
      %v615 = vshll.u32 920167782, %v600
      %v616 = vshrl.u32 1326507024, %v601
      %v617 = vor.u32 %v615, %v616
      %vm618 = vcmp.lt.s32.totalorder %v599, 1
      %vm619 = vcmp.lt.s32.totalorder %v599, 2
      %vm620 = vcmp.lt.s32.totalorder %v599, 3
      %vm621 = vcmp.lt.s32.totalorder %v599, 4
      %v622 = vsel %vm618, %v602, %v605
      %v623 = vsel %vm621, %v611, 2102212464
      %v624 = vsel %vm620, %v608, %v623
      %v625 = vsel %vm619, %v622, %v624
      %v626 = vsel %vm618, %v605, %v608
      %v627 = vsel %vm621, %v614, 920167782
      %v628 = vsel %vm620, %v611, %v627
      %v629 = vsel %vm619, %v626, %v628
      %v630 = vsel %vm618, %v608, %v611
      %v631 = vsel %vm621, %v617, 1326507024
      %v632 = vsel %vm620, %v614, %v631
      %v633 = vsel %vm619, %v630, %v632
      %v634 = vshll.u32 %v594, 8
      %v635 = vmul.u32.u64.compose %v634, %v633
      %v636 = vextract.low.u32 %v635
      %v637 = vextract.high.u32 %v635
      %v638 = vmul.u32.u64.compose %v634, %v629
      %v639 = vextract.low.u32 %v638
      %v640 = vextract.high.u32 %v638
      %v641 = vmul.u32 %v634, %v625
      %v642 = vadd.s32 %v637, %v639
      %vm643 = vc.u32 %v637, %v639
      %v644 = vadd.s32 %v640, 1
      %v645 = vsel %vm643, %v644, %v640
      %v646 = vadd.s32 %v641, %v645
      %v647 = vadd.s32 %v646, 536870912
      %v648 = vshrl.u32 %v647, 30
      %v649 = vshll.u32 %v648, 30
      %v650 = vsub.s32 %v646, %v649
      %vm651 = vcmp.lt.s32.totalorder %v650, 0
      %v652 = vsub.s32 0, %v650
      %v653 = vsel %vm651, %v652, %v650
      %v654 = vclz %v653
      %v655 = vsub.s32 %v654, 2
      %vm656 = vcmp.gt.s32.totalorder 0, %v655
      %v657 = vsel %vm656, 0, %v655
      %v658 = vsub.s32 32, %v657
      %v659 = vshll.u32 %v650, %v657
      %v660 = vshrl.u32 %v642, %v658
      %v661 = vor.u32 %v659, %v660
      %v662 = vsub.s32 4294967266, %v657
      %v663 = vadd.s32 %v662, 127
      %v664 = vshll.u32 %v663, 23
      %v665 = vor.u32 4788187, %v664
      %v666 = vand.u32 2147483647, %v665
      %v668 = vcvt.s32.f32 %v661
      %v669 = vmul.f32 %v668, %v666
      %v670 = vxor.u32 %v669, 2147483648
      %v671 = vsel %vm588, %v670, %v669
      %v672 = vsub.s32 4, %v648
      %v673 = vsel %vm588, %v672, %v648
      %v674 = vsel %vm587, %v364, %v671
      %v675 = vsel %vm587, 0, %v673
      %v676 = vcosq.f32.pop %v674
      %v677 = vsinq.f32.pop %v674
      %vm678 = vweird.f32 %v364
      %v679 = vadd.s32 %v675, 3
      %v680 = vand.u32 %v679, 3
      %vm681 = vcmp.lt.s32.totalorder %v680, 2
      %vm682 = vcmp.eq.s32.totalorder %v680, 0
      %v683 = vxor.u32 %v677, 2147483648
      %v684 = vsel %vm682, %v676, %v683
      %vm685 = vcmp.eq.s32.totalorder %v680, 2
      %v686 = vxor.u32 %v676, 2147483648
      %v687 = vsel %vm685, %v686, %v677
      %v688 = vsel %vm681, %v684, %v687
      %v689 = vsel %vm678, nan, %v688
      %v690 = vand.u32 2147483647, %v365
      %vm691 = vcmp.le.f32.partialorder %v690, 0.7853982
      %vm692 = vcmp.lt.s32.totalorder %v365, 0
      %v693 = vand.u32 %v365, 2139095040
      %v694 = vshrl.u32 %v693, 23
      %v695 = vsub.s32 %v694, 127
      %v696 = vand.u32 2147483647, %v365
      %v697 = vand.u32 %v696, 8388607
      %v698 = vor.u32 %v697, 8388608
      %v699 = vsub.s32 0, %v698
      %v700 = vadd.s32 %v695, 1
      %vm701 = vcmp.gt.s32.totalorder %v700, 0
      %v702 = vsel %vm701, %v700, 0
      %v703 = vshrl.u32 %v702, 5
      %v704 = vand.u32 %v702, 31
      %v705 = vsub.s32 32, %v704
      %v706 = vshrl.u32 683565275, %v705
      %v707 = vshll.u32 683565275, %v704
      %v708 = vshrl.u32 2475754826, %v705
      %v709 = vor.u32 %v707, %v708
      %v710 = vshll.u32 2475754826, %v704
      %v711 = vshrl.u32 2131351028, %v705
      %v712 = vor.u32 %v710, %v711
      %v713 = vshll.u32 2131351028, %v704
      %v714 = vshrl.u32 2102212464, %v705
      %v715 = vor.u32 %v713, %v714
      %v716 = vshll.u32 2102212464, %v704
      %v717 = vshrl.u32 920167782, %v705
      %v718 = vor.u32 %v716, %v717
      %v719 = vshll.u32 920167782, %v704
      %v720 = vshrl.u32 1326507024, %v705
      %v721 = vor.u32 %v719, %v720
      %vm722 = vcmp.lt.s32.totalorder %v703, 1
      %vm723 = vcmp.lt.s32.totalorder %v703, 2
      %vm724 = vcmp.lt.s32.totalorder %v703, 3
      %vm725 = vcmp.lt.s32.totalorder %v703, 4
      %v726 = vsel %vm722, %v706, %v709
      %v727 = vsel %vm725, %v715, 2102212464
      %v728 = vsel %vm724, %v712, %v727
      %v729 = vsel %vm723, %v726, %v728
      %v730 = vsel %vm722, %v709, %v712
      %v731 = vsel %vm725, %v718, 920167782
      %v732 = vsel %vm724, %v715, %v731
      %v733 = vsel %vm723, %v730, %v732
      %v734 = vsel %vm722, %v712, %v715
      %v735 = vsel %vm725, %v721, 1326507024
      %v736 = vsel %vm724, %v718, %v735
      %v737 = vsel %vm723, %v734, %v736
      %v738 = vshll.u32 %v698, 8
      %v739 = vmul.u32.u64.compose %v738, %v737
      %v740 = vextract.low.u32 %v739
      %v741 = vextract.high.u32 %v739
      %v742 = vmul.u32.u64.compose %v738, %v733
      %v743 = vextract.low.u32 %v742
      %v744 = vextract.high.u32 %v742
      %v745 = vmul.u32 %v738, %v729
      %v746 = vadd.s32 %v741, %v743
      %vm747 = vc.u32 %v741, %v743
      %v748 = vadd.s32 %v744, 1
      %v749 = vsel %vm747, %v748, %v744
      %v750 = vadd.s32 %v745, %v749
      %v751 = vadd.s32 %v750, 536870912
      %v752 = vshrl.u32 %v751, 30
      %v753 = vshll.u32 %v752, 30
      %v754 = vsub.s32 %v750, %v753
      %vm755 = vcmp.lt.s32.totalorder %v754, 0
      %v756 = vsub.s32 0, %v754
      %v757 = vsel %vm755, %v756, %v754
      %v758 = vclz %v757
      %v759 = vsub.s32 %v758, 2
      %vm760 = vcmp.gt.s32.totalorder 0, %v759
      %v761 = vsel %vm760, 0, %v759
      %v762 = vsub.s32 32, %v761
      %v763 = vshll.u32 %v754, %v761
      %v764 = vshrl.u32 %v746, %v762
      %v765 = vor.u32 %v763, %v764
      %v766 = vsub.s32 4294967266, %v761
      %v767 = vadd.s32 %v766, 127
      %v768 = vshll.u32 %v767, 23
      %v769 = vor.u32 4788187, %v768
      %v770 = vand.u32 2147483647, %v769
      %v772 = vcvt.s32.f32 %v765
      %v773 = vmul.f32 %v772, %v770
      %v774 = vxor.u32 %v773, 2147483648
      %v775 = vsel %vm692, %v774, %v773
      %v776 = vsub.s32 4, %v752
      %v777 = vsel %vm692, %v776, %v752
      %v778 = vsel %vm691, %v365, %v775
      %v779 = vsel %vm691, 0, %v777
      %v780 = vcosq.f32.pop %v778
      %v781 = vsinq.f32.pop %v778
      %vm782 = vweird.f32 %v365
      %v783 = vadd.s32 %v779, 3
      %v784 = vand.u32 %v783, 3
      %vm785 = vcmp.lt.s32.totalorder %v784, 2
      %vm786 = vcmp.eq.s32.totalorder %v784, 0
      %v787 = vxor.u32 %v781, 2147483648
      %v788 = vsel %vm786, %v780, %v787
      %vm789 = vcmp.eq.s32.totalorder %v784, 2
      %v790 = vxor.u32 %v780, 2147483648
      %v791 = vsel %vm789, %v790, %v781
      %v792 = vsel %vm785, %v788, %v791
      %v793 = vsel %vm782, nan, %v792
      %v794 = vand.u32 2147483647, %v366
      %vm795 = vcmp.le.f32.partialorder %v794, 0.7853982
      %vm796 = vcmp.lt.s32.totalorder %v366, 0
      %v797 = vand.u32 %v366, 2139095040
      %v798 = vshrl.u32 %v797, 23
      %v799 = vsub.s32 %v798, 127
      %v800 = vand.u32 2147483647, %v366
      %v801 = vand.u32 %v800, 8388607
      %v802 = vor.u32 %v801, 8388608
      %v803 = vsub.s32 0, %v802
      %v804 = vadd.s32 %v799, 1
      %vm805 = vcmp.gt.s32.totalorder %v804, 0
      %v806 = vsel %vm805, %v804, 0
      %v807 = vshrl.u32 %v806, 5
      %v808 = vand.u32 %v806, 31
      %v809 = vsub.s32 32, %v808
      %v810 = vshrl.u32 683565275, %v809
      %v811 = vshll.u32 683565275, %v808
      %v812 = vshrl.u32 2475754826, %v809
      %v813 = vor.u32 %v811, %v812
      %v814 = vshll.u32 2475754826, %v808
      %v815 = vshrl.u32 2131351028, %v809
      %v816 = vor.u32 %v814, %v815
      %v817 = vshll.u32 2131351028, %v808
      %v818 = vshrl.u32 2102212464, %v809
      %v819 = vor.u32 %v817, %v818
      %v820 = vshll.u32 2102212464, %v808
      %v821 = vshrl.u32 920167782, %v809
      %v822 = vor.u32 %v820, %v821
      %v823 = vshll.u32 920167782, %v808
      %v824 = vshrl.u32 1326507024, %v809
      %v825 = vor.u32 %v823, %v824
      %vm826 = vcmp.lt.s32.totalorder %v807, 1
      %vm827 = vcmp.lt.s32.totalorder %v807, 2
      %vm828 = vcmp.lt.s32.totalorder %v807, 3
      %vm829 = vcmp.lt.s32.totalorder %v807, 4
      %v830 = vsel %vm826, %v810, %v813
      %v831 = vsel %vm829, %v819, 2102212464
      %v832 = vsel %vm828, %v816, %v831
      %v833 = vsel %vm827, %v830, %v832
      %v834 = vsel %vm826, %v813, %v816
      %v835 = vsel %vm829, %v822, 920167782
      %v836 = vsel %vm828, %v819, %v835
      %v837 = vsel %vm827, %v834, %v836
      %v838 = vsel %vm826, %v816, %v819
      %v839 = vsel %vm829, %v825, 1326507024
      %v840 = vsel %vm828, %v822, %v839
      %v841 = vsel %vm827, %v838, %v840
      %v842 = vshll.u32 %v802, 8
      %v843 = vmul.u32.u64.compose %v842, %v841
      %v844 = vextract.low.u32 %v843
      %v845 = vextract.high.u32 %v843
      %v846 = vmul.u32.u64.compose %v842, %v837
      %v847 = vextract.low.u32 %v846
      %v848 = vextract.high.u32 %v846
      %v849 = vmul.u32 %v842, %v833
      %v850 = vadd.s32 %v845, %v847
      %vm851 = vc.u32 %v845, %v847
      %v852 = vadd.s32 %v848, 1
      %v853 = vsel %vm851, %v852, %v848
      %v854 = vadd.s32 %v849, %v853
      %v855 = vadd.s32 %v854, 536870912
      %v856 = vshrl.u32 %v855, 30
      %v857 = vshll.u32 %v856, 30
      %v858 = vsub.s32 %v854, %v857
      %vm859 = vcmp.lt.s32.totalorder %v858, 0
      %v860 = vsub.s32 0, %v858
      %v861 = vsel %vm859, %v860, %v858
      %v862 = vclz %v861
      %v863 = vsub.s32 %v862, 2
      %vm864 = vcmp.gt.s32.totalorder 0, %v863
      %v865 = vsel %vm864, 0, %v863
      %v866 = vsub.s32 32, %v865
      %v867 = vshll.u32 %v858, %v865
      %v868 = vshrl.u32 %v850, %v866
      %v869 = vor.u32 %v867, %v868
      %v870 = vsub.s32 4294967266, %v865
      %v871 = vadd.s32 %v870, 127
      %v872 = vshll.u32 %v871, 23
      %v873 = vor.u32 4788187, %v872
      %v874 = vand.u32 2147483647, %v873
      %v876 = vcvt.s32.f32 %v869
      %v877 = vmul.f32 %v876, %v874
      %v878 = vxor.u32 %v877, 2147483648
      %v879 = vsel %vm796, %v878, %v877
      %v880 = vsub.s32 4, %v856
      %v881 = vsel %vm796, %v880, %v856
      %v882 = vsel %vm795, %v366, %v879
      %v883 = vsel %vm795, 0, %v881
      %v884 = vcosq.f32.pop %v882
      %v885 = vsinq.f32.pop %v882
      %vm886 = vweird.f32 %v366
      %v887 = vadd.s32 %v883, 3
      %v888 = vand.u32 %v887, 3
      %vm889 = vcmp.lt.s32.totalorder %v888, 2
      %vm890 = vcmp.eq.s32.totalorder %v888, 0
      %v891 = vxor.u32 %v885, 2147483648
      %v892 = vsel %vm890, %v884, %v891
      %vm893 = vcmp.eq.s32.totalorder %v888, 2
      %v894 = vxor.u32 %v884, 2147483648
      %v895 = vsel %vm893, %v894, %v885
      %v896 = vsel %vm889, %v892, %v895
      %v897 = vsel %vm886, nan, %v896
      %v898 = vand.u32 2147483647, %v367
      %vm899 = vcmp.le.f32.partialorder %v898, 0.7853982
      %vm900 = vcmp.lt.s32.totalorder %v367, 0
      %v901 = vand.u32 %v367, 2139095040
      %v902 = vshrl.u32 %v901, 23
      %v903 = vsub.s32 %v902, 127
      %v904 = vand.u32 2147483647, %v367
      %v905 = vand.u32 %v904, 8388607
      %v906 = vor.u32 %v905, 8388608
      %v907 = vsub.s32 0, %v906
      %v908 = vadd.s32 %v903, 1
      %vm909 = vcmp.gt.s32.totalorder %v908, 0
      %v910 = vsel %vm909, %v908, 0
      %v911 = vshrl.u32 %v910, 5
      %v912 = vand.u32 %v910, 31
      %v913 = vsub.s32 32, %v912
      %v914 = vshrl.u32 683565275, %v913
      %v915 = vshll.u32 683565275, %v912
      %v916 = vshrl.u32 2475754826, %v913
      %v917 = vor.u32 %v915, %v916
      %v918 = vshll.u32 2475754826, %v912
      %v919 = vshrl.u32 2131351028, %v913
      %v920 = vor.u32 %v918, %v919
      %v921 = vshll.u32 2131351028, %v912
      %v922 = vshrl.u32 2102212464, %v913
      %v923 = vor.u32 %v921, %v922
      %v924 = vshll.u32 2102212464, %v912
      %v925 = vshrl.u32 920167782, %v913
      %v926 = vor.u32 %v924, %v925
      %v927 = vshll.u32 920167782, %v912
      %v928 = vshrl.u32 1326507024, %v913
      %v929 = vor.u32 %v927, %v928
      %vm930 = vcmp.lt.s32.totalorder %v911, 1
      %vm931 = vcmp.lt.s32.totalorder %v911, 2
      %vm932 = vcmp.lt.s32.totalorder %v911, 3
      %vm933 = vcmp.lt.s32.totalorder %v911, 4
      %v934 = vsel %vm930, %v914, %v917
      %v935 = vsel %vm933, %v923, 2102212464
      %v936 = vsel %vm932, %v920, %v935
      %v937 = vsel %vm931, %v934, %v936
      %v938 = vsel %vm930, %v917, %v920
      %v939 = vsel %vm933, %v926, 920167782
      %v940 = vsel %vm932, %v923, %v939
      %v941 = vsel %vm931, %v938, %v940
      %v942 = vsel %vm930, %v920, %v923
      %v943 = vsel %vm933, %v929, 1326507024
      %v944 = vsel %vm932, %v926, %v943
      %v945 = vsel %vm931, %v942, %v944
      %v946 = vshll.u32 %v906, 8
      %v947 = vmul.u32.u64.compose %v946, %v945
      %v948 = vextract.low.u32 %v947
      %v949 = vextract.high.u32 %v947
      %v950 = vmul.u32.u64.compose %v946, %v941
      %v951 = vextract.low.u32 %v950
      %v952 = vextract.high.u32 %v950
      %v953 = vmul.u32 %v946, %v937
      %v954 = vadd.s32 %v949, %v951
      %vm955 = vc.u32 %v949, %v951
      %v956 = vadd.s32 %v952, 1
      %v957 = vsel %vm955, %v956, %v952
      %v958 = vadd.s32 %v953, %v957
      %v959 = vadd.s32 %v958, 536870912
      %v960 = vshrl.u32 %v959, 30
      %v961 = vshll.u32 %v960, 30
      %v962 = vsub.s32 %v958, %v961
      %vm963 = vcmp.lt.s32.totalorder %v962, 0
      %v964 = vsub.s32 0, %v962
      %v965 = vsel %vm963, %v964, %v962
      %v966 = vclz %v965
      %v967 = vsub.s32 %v966, 2
      %vm968 = vcmp.gt.s32.totalorder 0, %v967
      %v969 = vsel %vm968, 0, %v967
      %v970 = vsub.s32 32, %v969
      %v971 = vshll.u32 %v962, %v969
      %v972 = vshrl.u32 %v954, %v970
      %v973 = vor.u32 %v971, %v972
      %v974 = vsub.s32 4294967266, %v969
      %v975 = vadd.s32 %v974, 127
      %v976 = vshll.u32 %v975, 23
      %v977 = vor.u32 4788187, %v976
      %v978 = vand.u32 2147483647, %v977
      %v980 = vcvt.s32.f32 %v973
      %v981 = vmul.f32 %v980, %v978
      %v982 = vxor.u32 %v981, 2147483648
      %v983 = vsel %vm900, %v982, %v981
      %v984 = vsub.s32 4, %v960
      %v985 = vsel %vm900, %v984, %v960
      %v986 = vsel %vm899, %v367, %v983
      %v987 = vsel %vm899, 0, %v985
      %v988 = vcosq.f32.pop %v986
      %v989 = vsinq.f32.pop %v986
      %vm990 = vweird.f32 %v367
      %v991 = vadd.s32 %v987, 3
      %v992 = vand.u32 %v991, 3
      %vm993 = vcmp.lt.s32.totalorder %v992, 2
      %vm994 = vcmp.eq.s32.totalorder %v992, 0
      %v995 = vxor.u32 %v989, 2147483648
      %v996 = vsel %vm994, %v988, %v995
      %vm997 = vcmp.eq.s32.totalorder %v992, 2
      %v998 = vxor.u32 %v988, 2147483648
      %v999 = vsel %vm997, %v998, %v989
      %v1000 = vsel %vm993, %v996, %v999
      %v1001 = vsel %vm990, nan, %v1000
      %v1002 = vand.u32 2147483647, %v368
      %vm1003 = vcmp.le.f32.partialorder %v1002, 0.7853982
      %vm1004 = vcmp.lt.s32.totalorder %v368, 0
      %v1005 = vand.u32 %v368, 2139095040
      %v1006 = vshrl.u32 %v1005, 23
      %v1007 = vsub.s32 %v1006, 127
      %v1008 = vand.u32 2147483647, %v368
      %v1009 = vand.u32 %v1008, 8388607
      %v1010 = vor.u32 %v1009, 8388608
      %v1011 = vsub.s32 0, %v1010
      %v1012 = vadd.s32 %v1007, 1
      %vm1013 = vcmp.gt.s32.totalorder %v1012, 0
      %v1014 = vsel %vm1013, %v1012, 0
      %v1015 = vshrl.u32 %v1014, 5
      %v1016 = vand.u32 %v1014, 31
      %v1017 = vsub.s32 32, %v1016
      %v1018 = vshrl.u32 683565275, %v1017
      %v1019 = vshll.u32 683565275, %v1016
      %v1020 = vshrl.u32 2475754826, %v1017
      %v1021 = vor.u32 %v1019, %v1020
      %v1022 = vshll.u32 2475754826, %v1016
      %v1023 = vshrl.u32 2131351028, %v1017
      %v1024 = vor.u32 %v1022, %v1023
      %v1025 = vshll.u32 2131351028, %v1016
      %v1026 = vshrl.u32 2102212464, %v1017
      %v1027 = vor.u32 %v1025, %v1026
      %v1028 = vshll.u32 2102212464, %v1016
      %v1029 = vshrl.u32 920167782, %v1017
      %v1030 = vor.u32 %v1028, %v1029
      %v1031 = vshll.u32 920167782, %v1016
      %v1032 = vshrl.u32 1326507024, %v1017
      %v1033 = vor.u32 %v1031, %v1032
      %vm1034 = vcmp.lt.s32.totalorder %v1015, 1
      %vm1035 = vcmp.lt.s32.totalorder %v1015, 2
      %vm1036 = vcmp.lt.s32.totalorder %v1015, 3
      %vm1037 = vcmp.lt.s32.totalorder %v1015, 4
      %v1038 = vsel %vm1034, %v1018, %v1021
      %v1039 = vsel %vm1037, %v1027, 2102212464
      %v1040 = vsel %vm1036, %v1024, %v1039
      %v1041 = vsel %vm1035, %v1038, %v1040
      %v1042 = vsel %vm1034, %v1021, %v1024
      %v1043 = vsel %vm1037, %v1030, 920167782
      %v1044 = vsel %vm1036, %v1027, %v1043
      %v1045 = vsel %vm1035, %v1042, %v1044
      %v1046 = vsel %vm1034, %v1024, %v1027
      %v1047 = vsel %vm1037, %v1033, 1326507024
      %v1048 = vsel %vm1036, %v1030, %v1047
      %v1049 = vsel %vm1035, %v1046, %v1048
      %v1050 = vshll.u32 %v1010, 8
      %v1051 = vmul.u32.u64.compose %v1050, %v1049
      %v1052 = vextract.low.u32 %v1051
      %v1053 = vextract.high.u32 %v1051
      %v1054 = vmul.u32.u64.compose %v1050, %v1045
      %v1055 = vextract.low.u32 %v1054
      %v1056 = vextract.high.u32 %v1054
      %v1057 = vmul.u32 %v1050, %v1041
      %v1058 = vadd.s32 %v1053, %v1055
      %vm1059 = vc.u32 %v1053, %v1055
      %v1060 = vadd.s32 %v1056, 1
      %v1061 = vsel %vm1059, %v1060, %v1056
      %v1062 = vadd.s32 %v1057, %v1061
      %v1063 = vadd.s32 %v1062, 536870912
      %v1064 = vshrl.u32 %v1063, 30
      %v1065 = vshll.u32 %v1064, 30
      %v1066 = vsub.s32 %v1062, %v1065
      %vm1067 = vcmp.lt.s32.totalorder %v1066, 0
      %v1068 = vsub.s32 0, %v1066
      %v1069 = vsel %vm1067, %v1068, %v1066
      %v1070 = vclz %v1069
      %v1071 = vsub.s32 %v1070, 2
      %vm1072 = vcmp.gt.s32.totalorder 0, %v1071
      %v1073 = vsel %vm1072, 0, %v1071
      %v1074 = vsub.s32 32, %v1073
      %v1075 = vshll.u32 %v1066, %v1073
      %v1076 = vshrl.u32 %v1058, %v1074
      %v1077 = vor.u32 %v1075, %v1076
      %v1078 = vsub.s32 4294967266, %v1073
      %v1079 = vadd.s32 %v1078, 127
      %v1080 = vshll.u32 %v1079, 23
      %v1081 = vor.u32 4788187, %v1080
      %v1082 = vand.u32 2147483647, %v1081
      %v1084 = vcvt.s32.f32 %v1077
      %v1085 = vmul.f32 %v1084, %v1082
      %v1086 = vxor.u32 %v1085, 2147483648
      %v1087 = vsel %vm1004, %v1086, %v1085
      %v1088 = vsub.s32 4, %v1064
      %v1089 = vsel %vm1004, %v1088, %v1064
      %v1090 = vsel %vm1003, %v368, %v1087
      %v1091 = vsel %vm1003, 0, %v1089
      %v1092 = vcosq.f32.pop %v1090
      %v1093 = vsinq.f32.pop %v1090
      %vm1094 = vweird.f32 %v368
      %v1095 = vadd.s32 %v1091, 3
      %v1096 = vand.u32 %v1095, 3
      %vm1097 = vcmp.lt.s32.totalorder %v1096, 2
      %vm1098 = vcmp.eq.s32.totalorder %v1096, 0
      %v1099 = vxor.u32 %v1093, 2147483648
      %v1100 = vsel %vm1098, %v1092, %v1099
      %vm1101 = vcmp.eq.s32.totalorder %v1096, 2
      %v1102 = vxor.u32 %v1092, 2147483648
      %v1103 = vsel %vm1101, %v1102, %v1093
      %v1104 = vsel %vm1097, %v1100, %v1103
      %v1105 = vsel %vm1094, nan, %v1104
      %v1106 = vand.u32 2147483647, %v369
      %vm1107 = vcmp.le.f32.partialorder %v1106, 0.7853982
      %vm1108 = vcmp.lt.s32.totalorder %v369, 0
      %v1109 = vand.u32 %v369, 2139095040
      %v1110 = vshrl.u32 %v1109, 23
      %v1111 = vsub.s32 %v1110, 127
      %v1112 = vand.u32 2147483647, %v369
      %v1113 = vand.u32 %v1112, 8388607
      %v1114 = vor.u32 %v1113, 8388608
      %v1115 = vsub.s32 0, %v1114
      %v1116 = vadd.s32 %v1111, 1
      %vm1117 = vcmp.gt.s32.totalorder %v1116, 0
      %v1118 = vsel %vm1117, %v1116, 0
      %v1119 = vshrl.u32 %v1118, 5
      %v1120 = vand.u32 %v1118, 31
      %v1121 = vsub.s32 32, %v1120
      %v1122 = vshrl.u32 683565275, %v1121
      %v1123 = vshll.u32 683565275, %v1120
      %v1124 = vshrl.u32 2475754826, %v1121
      %v1125 = vor.u32 %v1123, %v1124
      %v1126 = vshll.u32 2475754826, %v1120
      %v1127 = vshrl.u32 2131351028, %v1121
      %v1128 = vor.u32 %v1126, %v1127
      %v1129 = vshll.u32 2131351028, %v1120
      %v1130 = vshrl.u32 2102212464, %v1121
      %v1131 = vor.u32 %v1129, %v1130
      %v1132 = vshll.u32 2102212464, %v1120
      %v1133 = vshrl.u32 920167782, %v1121
      %v1134 = vor.u32 %v1132, %v1133
      %v1135 = vshll.u32 920167782, %v1120
      %v1136 = vshrl.u32 1326507024, %v1121
      %v1137 = vor.u32 %v1135, %v1136
      %vm1138 = vcmp.lt.s32.totalorder %v1119, 1
      %vm1139 = vcmp.lt.s32.totalorder %v1119, 2
      %vm1140 = vcmp.lt.s32.totalorder %v1119, 3
      %vm1141 = vcmp.lt.s32.totalorder %v1119, 4
      %v1142 = vsel %vm1138, %v1122, %v1125
      %v1143 = vsel %vm1141, %v1131, 2102212464
      %v1144 = vsel %vm1140, %v1128, %v1143
      %v1145 = vsel %vm1139, %v1142, %v1144
      %v1146 = vsel %vm1138, %v1125, %v1128
      %v1147 = vsel %vm1141, %v1134, 920167782
      %v1148 = vsel %vm1140, %v1131, %v1147
      %v1149 = vsel %vm1139, %v1146, %v1148
      %v1150 = vsel %vm1138, %v1128, %v1131
      %v1151 = vsel %vm1141, %v1137, 1326507024
      %v1152 = vsel %vm1140, %v1134, %v1151
      %v1153 = vsel %vm1139, %v1150, %v1152
      %v1154 = vshll.u32 %v1114, 8
      %v1155 = vmul.u32.u64.compose %v1154, %v1153
      %v1156 = vextract.low.u32 %v1155
      %v1157 = vextract.high.u32 %v1155
      %v1158 = vmul.u32.u64.compose %v1154, %v1149
      %v1159 = vextract.low.u32 %v1158
      %v1160 = vextract.high.u32 %v1158
      %v1161 = vmul.u32 %v1154, %v1145
      %v1162 = vadd.s32 %v1157, %v1159
      %vm1163 = vc.u32 %v1157, %v1159
      %v1164 = vadd.s32 %v1160, 1
      %v1165 = vsel %vm1163, %v1164, %v1160
      %v1166 = vadd.s32 %v1161, %v1165
      %v1167 = vadd.s32 %v1166, 536870912
      %v1168 = vshrl.u32 %v1167, 30
      %v1169 = vshll.u32 %v1168, 30
      %v1170 = vsub.s32 %v1166, %v1169
      %vm1171 = vcmp.lt.s32.totalorder %v1170, 0
      %v1172 = vsub.s32 0, %v1170
      %v1173 = vsel %vm1171, %v1172, %v1170
      %v1174 = vclz %v1173
      %v1175 = vsub.s32 %v1174, 2
      %vm1176 = vcmp.gt.s32.totalorder 0, %v1175
      %v1177 = vsel %vm1176, 0, %v1175
      %v1178 = vsub.s32 32, %v1177
      %v1179 = vshll.u32 %v1170, %v1177
      %v1180 = vshrl.u32 %v1162, %v1178
      %v1181 = vor.u32 %v1179, %v1180
      %v1182 = vsub.s32 4294967266, %v1177
      %v1183 = vadd.s32 %v1182, 127
      %v1184 = vshll.u32 %v1183, 23
      %v1185 = vor.u32 4788187, %v1184
      %v1186 = vand.u32 2147483647, %v1185
      %v1188 = vcvt.s32.f32 %v1181
      %v1189 = vmul.f32 %v1188, %v1186
      %v1190 = vxor.u32 %v1189, 2147483648
      %v1191 = vsel %vm1108, %v1190, %v1189
      %v1192 = vsub.s32 4, %v1168
      %v1193 = vsel %vm1108, %v1192, %v1168
      %v1194 = vsel %vm1107, %v369, %v1191
      %v1195 = vsel %vm1107, 0, %v1193
      %v1196 = vcosq.f32.pop %v1194
      %v1197 = vsinq.f32.pop %v1194
      %vm1198 = vweird.f32 %v369
      %v1199 = vadd.s32 %v1195, 3
      %v1200 = vand.u32 %v1199, 3
      %vm1201 = vcmp.lt.s32.totalorder %v1200, 2
      %vm1202 = vcmp.eq.s32.totalorder %v1200, 0
      %v1203 = vxor.u32 %v1197, 2147483648
      %v1204 = vsel %vm1202, %v1196, %v1203
      %vm1205 = vcmp.eq.s32.totalorder %v1200, 2
      %v1206 = vxor.u32 %v1196, 2147483648
      %v1207 = vsel %vm1205, %v1206, %v1197
      %v1208 = vsel %vm1201, %v1204, %v1207
      %v1209 = vsel %vm1198, nan, %v1208
      %v1210 = vand.u32 2147483647, %v370
      %vm1211 = vcmp.le.f32.partialorder %v1210, 0.7853982
      %vm1212 = vcmp.lt.s32.totalorder %v370, 0
      %v1213 = vand.u32 %v370, 2139095040
      %v1214 = vshrl.u32 %v1213, 23
      %v1215 = vsub.s32 %v1214, 127
      %v1216 = vand.u32 2147483647, %v370
      %v1217 = vand.u32 %v1216, 8388607
      %v1218 = vor.u32 %v1217, 8388608
      %v1219 = vsub.s32 0, %v1218
      %v1220 = vadd.s32 %v1215, 1
      %vm1221 = vcmp.gt.s32.totalorder %v1220, 0
      %v1222 = vsel %vm1221, %v1220, 0
      %v1223 = vshrl.u32 %v1222, 5
      %v1224 = vand.u32 %v1222, 31
      %v1225 = vsub.s32 32, %v1224
      %v1226 = vshrl.u32 683565275, %v1225
      %v1227 = vshll.u32 683565275, %v1224
      %v1228 = vshrl.u32 2475754826, %v1225
      %v1229 = vor.u32 %v1227, %v1228
      %v1230 = vshll.u32 2475754826, %v1224
      %v1231 = vshrl.u32 2131351028, %v1225
      %v1232 = vor.u32 %v1230, %v1231
      %v1233 = vshll.u32 2131351028, %v1224
      %v1234 = vshrl.u32 2102212464, %v1225
      %v1235 = vor.u32 %v1233, %v1234
      %v1236 = vshll.u32 2102212464, %v1224
      %v1237 = vshrl.u32 920167782, %v1225
      %v1238 = vor.u32 %v1236, %v1237
      %v1239 = vshll.u32 920167782, %v1224
      %v1240 = vshrl.u32 1326507024, %v1225
      %v1241 = vor.u32 %v1239, %v1240
      %vm1242 = vcmp.lt.s32.totalorder %v1223, 1
      %vm1243 = vcmp.lt.s32.totalorder %v1223, 2
      %vm1244 = vcmp.lt.s32.totalorder %v1223, 3
      %vm1245 = vcmp.lt.s32.totalorder %v1223, 4
      %v1246 = vsel %vm1242, %v1226, %v1229
      %v1247 = vsel %vm1245, %v1235, 2102212464
      %v1248 = vsel %vm1244, %v1232, %v1247
      %v1249 = vsel %vm1243, %v1246, %v1248
      %v1250 = vsel %vm1242, %v1229, %v1232
      %v1251 = vsel %vm1245, %v1238, 920167782
      %v1252 = vsel %vm1244, %v1235, %v1251
      %v1253 = vsel %vm1243, %v1250, %v1252
      %v1254 = vsel %vm1242, %v1232, %v1235
      %v1255 = vsel %vm1245, %v1241, 1326507024
      %v1256 = vsel %vm1244, %v1238, %v1255
      %v1257 = vsel %vm1243, %v1254, %v1256
      %v1258 = vshll.u32 %v1218, 8
      %v1259 = vmul.u32.u64.compose %v1258, %v1257
      %v1260 = vextract.low.u32 %v1259
      %v1261 = vextract.high.u32 %v1259
      %v1262 = vmul.u32.u64.compose %v1258, %v1253
      %v1263 = vextract.low.u32 %v1262
      %v1264 = vextract.high.u32 %v1262
      %v1265 = vmul.u32 %v1258, %v1249
      %v1266 = vadd.s32 %v1261, %v1263
      %vm1267 = vc.u32 %v1261, %v1263
      %v1268 = vadd.s32 %v1264, 1
      %v1269 = vsel %vm1267, %v1268, %v1264
      %v1270 = vadd.s32 %v1265, %v1269
      %v1271 = vadd.s32 %v1270, 536870912
      %v1272 = vshrl.u32 %v1271, 30
      %v1273 = vshll.u32 %v1272, 30
      %v1274 = vsub.s32 %v1270, %v1273
      %vm1275 = vcmp.lt.s32.totalorder %v1274, 0
      %v1276 = vsub.s32 0, %v1274
      %v1277 = vsel %vm1275, %v1276, %v1274
      %v1278 = vclz %v1277
      %v1279 = vsub.s32 %v1278, 2
      %vm1280 = vcmp.gt.s32.totalorder 0, %v1279
      %v1281 = vsel %vm1280, 0, %v1279
      %v1282 = vsub.s32 32, %v1281
      %v1283 = vshll.u32 %v1274, %v1281
      %v1284 = vshrl.u32 %v1266, %v1282
      %v1285 = vor.u32 %v1283, %v1284
      %v1286 = vsub.s32 4294967266, %v1281
      %v1287 = vadd.s32 %v1286, 127
      %v1288 = vshll.u32 %v1287, 23
      %v1289 = vor.u32 4788187, %v1288
      %v1290 = vand.u32 2147483647, %v1289
      %v1292 = vcvt.s32.f32 %v1285
      %v1293 = vmul.f32 %v1292, %v1290
      %v1294 = vxor.u32 %v1293, 2147483648
      %v1295 = vsel %vm1212, %v1294, %v1293
      %v1296 = vsub.s32 4, %v1272
      %v1297 = vsel %vm1212, %v1296, %v1272
      %v1298 = vsel %vm1211, %v370, %v1295
      %v1299 = vsel %vm1211, 0, %v1297
      %v1300 = vcosq.f32.pop %v1298
      %v1301 = vsinq.f32.pop %v1298
      %vm1302 = vweird.f32 %v370
      %v1303 = vadd.s32 %v1299, 3
      %v1304 = vand.u32 %v1303, 3
      %vm1305 = vcmp.lt.s32.totalorder %v1304, 2
      %vm1306 = vcmp.eq.s32.totalorder %v1304, 0
      %v1307 = vxor.u32 %v1301, 2147483648
      %v1308 = vsel %vm1306, %v1300, %v1307
      %vm1309 = vcmp.eq.s32.totalorder %v1304, 2
      %v1310 = vxor.u32 %v1300, 2147483648
      %v1311 = vsel %vm1309, %v1310, %v1301
      %v1312 = vsel %vm1305, %v1308, %v1311
      %v1313 = vsel %vm1302, nan, %v1312
      %v1314 = vand.u32 2147483647, %v371
      %vm1315 = vcmp.le.f32.partialorder %v1314, 0.7853982
      %vm1316 = vcmp.lt.s32.totalorder %v371, 0
      %v1317 = vand.u32 %v371, 2139095040
      %v1318 = vshrl.u32 %v1317, 23
      %v1319 = vsub.s32 %v1318, 127
      %v1320 = vand.u32 2147483647, %v371
      %v1321 = vand.u32 %v1320, 8388607
      %v1322 = vor.u32 %v1321, 8388608
      %v1323 = vsub.s32 0, %v1322
      %v1324 = vadd.s32 %v1319, 1
      %vm1325 = vcmp.gt.s32.totalorder %v1324, 0
      %v1326 = vsel %vm1325, %v1324, 0
      %v1327 = vshrl.u32 %v1326, 5
      %v1328 = vand.u32 %v1326, 31
      %v1329 = vsub.s32 32, %v1328
      %v1330 = vshrl.u32 683565275, %v1329
      %v1331 = vshll.u32 683565275, %v1328
      %v1332 = vshrl.u32 2475754826, %v1329
      %v1333 = vor.u32 %v1331, %v1332
      %v1334 = vshll.u32 2475754826, %v1328
      %v1335 = vshrl.u32 2131351028, %v1329
      %v1336 = vor.u32 %v1334, %v1335
      %v1337 = vshll.u32 2131351028, %v1328
      %v1338 = vshrl.u32 2102212464, %v1329
      %v1339 = vor.u32 %v1337, %v1338
      %v1340 = vshll.u32 2102212464, %v1328
      %v1341 = vshrl.u32 920167782, %v1329
      %v1342 = vor.u32 %v1340, %v1341
      %v1343 = vshll.u32 920167782, %v1328
      %v1344 = vshrl.u32 1326507024, %v1329
      %v1345 = vor.u32 %v1343, %v1344
      %vm1346 = vcmp.lt.s32.totalorder %v1327, 1
      %vm1347 = vcmp.lt.s32.totalorder %v1327, 2
      %vm1348 = vcmp.lt.s32.totalorder %v1327, 3
      %vm1349 = vcmp.lt.s32.totalorder %v1327, 4
      %v1350 = vsel %vm1346, %v1330, %v1333
      %v1351 = vsel %vm1349, %v1339, 2102212464
      %v1352 = vsel %vm1348, %v1336, %v1351
      %v1353 = vsel %vm1347, %v1350, %v1352
      %v1354 = vsel %vm1346, %v1333, %v1336
      %v1355 = vsel %vm1349, %v1342, 920167782
      %v1356 = vsel %vm1348, %v1339, %v1355
      %v1357 = vsel %vm1347, %v1354, %v1356
      %v1358 = vsel %vm1346, %v1336, %v1339
      %v1359 = vsel %vm1349, %v1345, 1326507024
      %v1360 = vsel %vm1348, %v1342, %v1359
      %v1361 = vsel %vm1347, %v1358, %v1360
      %v1362 = vshll.u32 %v1322, 8
      %v1363 = vmul.u32.u64.compose %v1362, %v1361
      %v1364 = vextract.low.u32 %v1363
      %v1365 = vextract.high.u32 %v1363
      %v1366 = vmul.u32.u64.compose %v1362, %v1357
      %v1367 = vextract.low.u32 %v1366
      %v1368 = vextract.high.u32 %v1366
      %v1369 = vmul.u32 %v1362, %v1353
      %v1370 = vadd.s32 %v1365, %v1367
      %vm1371 = vc.u32 %v1365, %v1367
      %v1372 = vadd.s32 %v1368, 1
      %v1373 = vsel %vm1371, %v1372, %v1368
      %v1374 = vadd.s32 %v1369, %v1373
      %v1375 = vadd.s32 %v1374, 536870912
      %v1376 = vshrl.u32 %v1375, 30
      %v1377 = vshll.u32 %v1376, 30
      %v1378 = vsub.s32 %v1374, %v1377
      %vm1379 = vcmp.lt.s32.totalorder %v1378, 0
      %v1380 = vsub.s32 0, %v1378
      %v1381 = vsel %vm1379, %v1380, %v1378
      %v1382 = vclz %v1381
      %v1383 = vsub.s32 %v1382, 2
      %vm1384 = vcmp.gt.s32.totalorder 0, %v1383
      %v1385 = vsel %vm1384, 0, %v1383
      %v1386 = vsub.s32 32, %v1385
      %v1387 = vshll.u32 %v1378, %v1385
      %v1388 = vshrl.u32 %v1370, %v1386
      %v1389 = vor.u32 %v1387, %v1388
      %v1390 = vsub.s32 4294967266, %v1385
      %v1391 = vadd.s32 %v1390, 127
      %v1392 = vshll.u32 %v1391, 23
      %v1393 = vor.u32 4788187, %v1392
      %v1394 = vand.u32 2147483647, %v1393
      %v1396 = vcvt.s32.f32 %v1389
      %v1397 = vmul.f32 %v1396, %v1394
      %v1398 = vxor.u32 %v1397, 2147483648
      %v1399 = vsel %vm1316, %v1398, %v1397
      %v1400 = vsub.s32 4, %v1376
      %v1401 = vsel %vm1316, %v1400, %v1376
      %v1402 = vsel %vm1315, %v371, %v1399
      %v1403 = vsel %vm1315, 0, %v1401
      %v1404 = vcosq.f32.pop %v1402
      %v1405 = vsinq.f32.pop %v1402
      %vm1406 = vweird.f32 %v371
      %v1407 = vadd.s32 %v1403, 3
      %v1408 = vand.u32 %v1407, 3
      %vm1409 = vcmp.lt.s32.totalorder %v1408, 2
      %vm1410 = vcmp.eq.s32.totalorder %v1408, 0
      %v1411 = vxor.u32 %v1405, 2147483648
      %v1412 = vsel %vm1410, %v1404, %v1411
      %vm1413 = vcmp.eq.s32.totalorder %v1408, 2
      %v1414 = vxor.u32 %v1404, 2147483648
      %v1415 = vsel %vm1413, %v1414, %v1405
      %v1416 = vsel %vm1409, %v1412, %v1415
      %v1417 = vsel %vm1406, nan, %v1416
      %v1418 = vand.u32 2147483647, %v372
      %vm1419 = vcmp.le.f32.partialorder %v1418, 0.7853982
      %vm1420 = vcmp.lt.s32.totalorder %v372, 0
      %v1421 = vand.u32 %v372, 2139095040
      %v1422 = vshrl.u32 %v1421, 23
      %v1423 = vsub.s32 %v1422, 127
      %v1424 = vand.u32 2147483647, %v372
      %v1425 = vand.u32 %v1424, 8388607
      %v1426 = vor.u32 %v1425, 8388608
      %v1427 = vsub.s32 0, %v1426
      %v1428 = vadd.s32 %v1423, 1
      %vm1429 = vcmp.gt.s32.totalorder %v1428, 0
      %v1430 = vsel %vm1429, %v1428, 0
      %v1431 = vshrl.u32 %v1430, 5
      %v1432 = vand.u32 %v1430, 31
      %v1433 = vsub.s32 32, %v1432
      %v1434 = vshrl.u32 683565275, %v1433
      %v1435 = vshll.u32 683565275, %v1432
      %v1436 = vshrl.u32 2475754826, %v1433
      %v1437 = vor.u32 %v1435, %v1436
      %v1438 = vshll.u32 2475754826, %v1432
      %v1439 = vshrl.u32 2131351028, %v1433
      %v1440 = vor.u32 %v1438, %v1439
      %v1441 = vshll.u32 2131351028, %v1432
      %v1442 = vshrl.u32 2102212464, %v1433
      %v1443 = vor.u32 %v1441, %v1442
      %v1444 = vshll.u32 2102212464, %v1432
      %v1445 = vshrl.u32 920167782, %v1433
      %v1446 = vor.u32 %v1444, %v1445
      %v1447 = vshll.u32 920167782, %v1432
      %v1448 = vshrl.u32 1326507024, %v1433
      %v1449 = vor.u32 %v1447, %v1448
      %vm1450 = vcmp.lt.s32.totalorder %v1431, 1
      %vm1451 = vcmp.lt.s32.totalorder %v1431, 2
      %vm1452 = vcmp.lt.s32.totalorder %v1431, 3
      %vm1453 = vcmp.lt.s32.totalorder %v1431, 4
      %v1454 = vsel %vm1450, %v1434, %v1437
      %v1455 = vsel %vm1453, %v1443, 2102212464
      %v1456 = vsel %vm1452, %v1440, %v1455
      %v1457 = vsel %vm1451, %v1454, %v1456
      %v1458 = vsel %vm1450, %v1437, %v1440
      %v1459 = vsel %vm1453, %v1446, 920167782
      %v1460 = vsel %vm1452, %v1443, %v1459
      %v1461 = vsel %vm1451, %v1458, %v1460
      %v1462 = vsel %vm1450, %v1440, %v1443
      %v1463 = vsel %vm1453, %v1449, 1326507024
      %v1464 = vsel %vm1452, %v1446, %v1463
      %v1465 = vsel %vm1451, %v1462, %v1464
      %v1466 = vshll.u32 %v1426, 8
      %v1467 = vmul.u32.u64.compose %v1466, %v1465
      %v1468 = vextract.low.u32 %v1467
      %v1469 = vextract.high.u32 %v1467
      %v1470 = vmul.u32.u64.compose %v1466, %v1461
      %v1471 = vextract.low.u32 %v1470
      %v1472 = vextract.high.u32 %v1470
      %v1473 = vmul.u32 %v1466, %v1457
      %v1474 = vadd.s32 %v1469, %v1471
      %vm1475 = vc.u32 %v1469, %v1471
      %v1476 = vadd.s32 %v1472, 1
      %v1477 = vsel %vm1475, %v1476, %v1472
      %v1478 = vadd.s32 %v1473, %v1477
      %v1479 = vadd.s32 %v1478, 536870912
      %v1480 = vshrl.u32 %v1479, 30
      %v1481 = vshll.u32 %v1480, 30
      %v1482 = vsub.s32 %v1478, %v1481
      %vm1483 = vcmp.lt.s32.totalorder %v1482, 0
      %v1484 = vsub.s32 0, %v1482
      %v1485 = vsel %vm1483, %v1484, %v1482
      %v1486 = vclz %v1485
      %v1487 = vsub.s32 %v1486, 2
      %vm1488 = vcmp.gt.s32.totalorder 0, %v1487
      %v1489 = vsel %vm1488, 0, %v1487
      %v1490 = vsub.s32 32, %v1489
      %v1491 = vshll.u32 %v1482, %v1489
      %v1492 = vshrl.u32 %v1474, %v1490
      %v1493 = vor.u32 %v1491, %v1492
      %v1494 = vsub.s32 4294967266, %v1489
      %v1495 = vadd.s32 %v1494, 127
      %v1496 = vshll.u32 %v1495, 23
      %v1497 = vor.u32 4788187, %v1496
      %v1498 = vand.u32 2147483647, %v1497
      %v1500 = vcvt.s32.f32 %v1493
      %v1501 = vmul.f32 %v1500, %v1498
      %v1502 = vxor.u32 %v1501, 2147483648
      %v1503 = vsel %vm1420, %v1502, %v1501
      %v1504 = vsub.s32 4, %v1480
      %v1505 = vsel %vm1420, %v1504, %v1480
      %v1506 = vsel %vm1419, %v372, %v1503
      %v1507 = vsel %vm1419, 0, %v1505
      %v1508 = vcosq.f32.pop %v1506
      %v1509 = vsinq.f32.pop %v1506
      %vm1510 = vweird.f32 %v372
      %v1511 = vadd.s32 %v1507, 3
      %v1512 = vand.u32 %v1511, 3
      %vm1513 = vcmp.lt.s32.totalorder %v1512, 2
      %vm1514 = vcmp.eq.s32.totalorder %v1512, 0
      %v1515 = vxor.u32 %v1509, 2147483648
      %v1516 = vsel %vm1514, %v1508, %v1515
      %vm1517 = vcmp.eq.s32.totalorder %v1512, 2
      %v1518 = vxor.u32 %v1508, 2147483648
      %v1519 = vsel %vm1517, %v1518, %v1509
      %v1520 = vsel %vm1513, %v1516, %v1519
      %v1521 = vsel %vm1510, nan, %v1520
      %v1522 = vand.u32 2147483647, %v373
      %vm1523 = vcmp.le.f32.partialorder %v1522, 0.7853982
      %vm1524 = vcmp.lt.s32.totalorder %v373, 0
      %v1525 = vand.u32 %v373, 2139095040
      %v1526 = vshrl.u32 %v1525, 23
      %v1527 = vsub.s32 %v1526, 127
      %v1528 = vand.u32 2147483647, %v373
      %v1529 = vand.u32 %v1528, 8388607
      %v1530 = vor.u32 %v1529, 8388608
      %v1531 = vsub.s32 0, %v1530
      %v1532 = vadd.s32 %v1527, 1
      %vm1533 = vcmp.gt.s32.totalorder %v1532, 0
      %v1534 = vsel %vm1533, %v1532, 0
      %v1535 = vshrl.u32 %v1534, 5
      %v1536 = vand.u32 %v1534, 31
      %v1537 = vsub.s32 32, %v1536
      %v1538 = vshrl.u32 683565275, %v1537
      %v1539 = vshll.u32 683565275, %v1536
      %v1540 = vshrl.u32 2475754826, %v1537
      %v1541 = vor.u32 %v1539, %v1540
      %v1542 = vshll.u32 2475754826, %v1536
      %v1543 = vshrl.u32 2131351028, %v1537
      %v1544 = vor.u32 %v1542, %v1543
      %v1545 = vshll.u32 2131351028, %v1536
      %v1546 = vshrl.u32 2102212464, %v1537
      %v1547 = vor.u32 %v1545, %v1546
      %v1548 = vshll.u32 2102212464, %v1536
      %v1549 = vshrl.u32 920167782, %v1537
      %v1550 = vor.u32 %v1548, %v1549
      %v1551 = vshll.u32 920167782, %v1536
      %v1552 = vshrl.u32 1326507024, %v1537
      %v1553 = vor.u32 %v1551, %v1552
      %vm1554 = vcmp.lt.s32.totalorder %v1535, 1
      %vm1555 = vcmp.lt.s32.totalorder %v1535, 2
      %vm1556 = vcmp.lt.s32.totalorder %v1535, 3
      %vm1557 = vcmp.lt.s32.totalorder %v1535, 4
      %v1558 = vsel %vm1554, %v1538, %v1541
      %v1559 = vsel %vm1557, %v1547, 2102212464
      %v1560 = vsel %vm1556, %v1544, %v1559
      %v1561 = vsel %vm1555, %v1558, %v1560
      %v1562 = vsel %vm1554, %v1541, %v1544
      %v1563 = vsel %vm1557, %v1550, 920167782
      %v1564 = vsel %vm1556, %v1547, %v1563
      %v1565 = vsel %vm1555, %v1562, %v1564
      %v1566 = vsel %vm1554, %v1544, %v1547
      %v1567 = vsel %vm1557, %v1553, 1326507024
      %v1568 = vsel %vm1556, %v1550, %v1567
      %v1569 = vsel %vm1555, %v1566, %v1568
      %v1570 = vshll.u32 %v1530, 8
      %v1571 = vmul.u32.u64.compose %v1570, %v1569
      %v1572 = vextract.low.u32 %v1571
      %v1573 = vextract.high.u32 %v1571
      %v1574 = vmul.u32.u64.compose %v1570, %v1565
      %v1575 = vextract.low.u32 %v1574
      %v1576 = vextract.high.u32 %v1574
      %v1577 = vmul.u32 %v1570, %v1561
      %v1578 = vadd.s32 %v1573, %v1575
      %vm1579 = vc.u32 %v1573, %v1575
      %v1580 = vadd.s32 %v1576, 1
      %v1581 = vsel %vm1579, %v1580, %v1576
      %v1582 = vadd.s32 %v1577, %v1581
      %v1583 = vadd.s32 %v1582, 536870912
      %v1584 = vshrl.u32 %v1583, 30
      %v1585 = vshll.u32 %v1584, 30
      %v1586 = vsub.s32 %v1582, %v1585
      %vm1587 = vcmp.lt.s32.totalorder %v1586, 0
      %v1588 = vsub.s32 0, %v1586
      %v1589 = vsel %vm1587, %v1588, %v1586
      %v1590 = vclz %v1589
      %v1591 = vsub.s32 %v1590, 2
      %vm1592 = vcmp.gt.s32.totalorder 0, %v1591
      %v1593 = vsel %vm1592, 0, %v1591
      %v1594 = vsub.s32 32, %v1593
      %v1595 = vshll.u32 %v1586, %v1593
      %v1596 = vshrl.u32 %v1578, %v1594
      %v1597 = vor.u32 %v1595, %v1596
      %v1598 = vsub.s32 4294967266, %v1593
      %v1599 = vadd.s32 %v1598, 127
      %v1600 = vshll.u32 %v1599, 23
      %v1601 = vor.u32 4788187, %v1600
      %v1602 = vand.u32 2147483647, %v1601
      %v1604 = vcvt.s32.f32 %v1597
      %v1605 = vmul.f32 %v1604, %v1602
      %v1606 = vxor.u32 %v1605, 2147483648
      %v1607 = vsel %vm1524, %v1606, %v1605
      %v1608 = vsub.s32 4, %v1584
      %v1609 = vsel %vm1524, %v1608, %v1584
      %v1610 = vsel %vm1523, %v373, %v1607
      %v1611 = vsel %vm1523, 0, %v1609
      %v1612 = vcosq.f32.pop %v1610
      %v1613 = vsinq.f32.pop %v1610
      %vm1614 = vweird.f32 %v373
      %v1615 = vadd.s32 %v1611, 3
      %v1616 = vand.u32 %v1615, 3
      %vm1617 = vcmp.lt.s32.totalorder %v1616, 2
      %vm1618 = vcmp.eq.s32.totalorder %v1616, 0
      %v1619 = vxor.u32 %v1613, 2147483648
      %v1620 = vsel %vm1618, %v1612, %v1619
      %vm1621 = vcmp.eq.s32.totalorder %v1616, 2
      %v1622 = vxor.u32 %v1612, 2147483648
      %v1623 = vsel %vm1621, %v1622, %v1613
      %v1624 = vsel %vm1617, %v1620, %v1623
      %v1625 = vsel %vm1614, nan, %v1624
      %v1626 = vand.u32 2147483647, %v374
      %vm1627 = vcmp.le.f32.partialorder %v1626, 0.7853982
      %vm1628 = vcmp.lt.s32.totalorder %v374, 0
      %v1629 = vand.u32 %v374, 2139095040
      %v1630 = vshrl.u32 %v1629, 23
      %v1631 = vsub.s32 %v1630, 127
      %v1632 = vand.u32 2147483647, %v374
      %v1633 = vand.u32 %v1632, 8388607
      %v1634 = vor.u32 %v1633, 8388608
      %v1635 = vsub.s32 0, %v1634
      %v1636 = vadd.s32 %v1631, 1
      %vm1637 = vcmp.gt.s32.totalorder %v1636, 0
      %v1638 = vsel %vm1637, %v1636, 0
      %v1639 = vshrl.u32 %v1638, 5
      %v1640 = vand.u32 %v1638, 31
      %v1641 = vsub.s32 32, %v1640
      %v1642 = vshrl.u32 683565275, %v1641
      %v1643 = vshll.u32 683565275, %v1640
      %v1644 = vshrl.u32 2475754826, %v1641
      %v1645 = vor.u32 %v1643, %v1644
      %v1646 = vshll.u32 2475754826, %v1640
      %v1647 = vshrl.u32 2131351028, %v1641
      %v1648 = vor.u32 %v1646, %v1647
      %v1649 = vshll.u32 2131351028, %v1640
      %v1650 = vshrl.u32 2102212464, %v1641
      %v1651 = vor.u32 %v1649, %v1650
      %v1652 = vshll.u32 2102212464, %v1640
      %v1653 = vshrl.u32 920167782, %v1641
      %v1654 = vor.u32 %v1652, %v1653
      %v1655 = vshll.u32 920167782, %v1640
      %v1656 = vshrl.u32 1326507024, %v1641
      %v1657 = vor.u32 %v1655, %v1656
      %vm1658 = vcmp.lt.s32.totalorder %v1639, 1
      %vm1659 = vcmp.lt.s32.totalorder %v1639, 2
      %vm1660 = vcmp.lt.s32.totalorder %v1639, 3
      %vm1661 = vcmp.lt.s32.totalorder %v1639, 4
      %v1662 = vsel %vm1658, %v1642, %v1645
      %v1663 = vsel %vm1661, %v1651, 2102212464
      %v1664 = vsel %vm1660, %v1648, %v1663
      %v1665 = vsel %vm1659, %v1662, %v1664
      %v1666 = vsel %vm1658, %v1645, %v1648
      %v1667 = vsel %vm1661, %v1654, 920167782
      %v1668 = vsel %vm1660, %v1651, %v1667
      %v1669 = vsel %vm1659, %v1666, %v1668
      %v1670 = vsel %vm1658, %v1648, %v1651
      %v1671 = vsel %vm1661, %v1657, 1326507024
      %v1672 = vsel %vm1660, %v1654, %v1671
      %v1673 = vsel %vm1659, %v1670, %v1672
      %v1674 = vshll.u32 %v1634, 8
      %v1675 = vmul.u32.u64.compose %v1674, %v1673
      %v1676 = vextract.low.u32 %v1675
      %v1677 = vextract.high.u32 %v1675
      %v1678 = vmul.u32.u64.compose %v1674, %v1669
      %v1679 = vextract.low.u32 %v1678
      %v1680 = vextract.high.u32 %v1678
      %v1681 = vmul.u32 %v1674, %v1665
      %v1682 = vadd.s32 %v1677, %v1679
      %vm1683 = vc.u32 %v1677, %v1679
      %v1684 = vadd.s32 %v1680, 1
      %v1685 = vsel %vm1683, %v1684, %v1680
      %v1686 = vadd.s32 %v1681, %v1685
      %v1687 = vadd.s32 %v1686, 536870912
      %v1688 = vshrl.u32 %v1687, 30
      %v1689 = vshll.u32 %v1688, 30
      %v1690 = vsub.s32 %v1686, %v1689
      %vm1691 = vcmp.lt.s32.totalorder %v1690, 0
      %v1692 = vsub.s32 0, %v1690
      %v1693 = vsel %vm1691, %v1692, %v1690
      %v1694 = vclz %v1693
      %v1695 = vsub.s32 %v1694, 2
      %vm1696 = vcmp.gt.s32.totalorder 0, %v1695
      %v1697 = vsel %vm1696, 0, %v1695
      %v1698 = vsub.s32 32, %v1697
      %v1699 = vshll.u32 %v1690, %v1697
      %v1700 = vshrl.u32 %v1682, %v1698
      %v1701 = vor.u32 %v1699, %v1700
      %v1702 = vsub.s32 4294967266, %v1697
      %v1703 = vadd.s32 %v1702, 127
      %v1704 = vshll.u32 %v1703, 23
      %v1705 = vor.u32 4788187, %v1704
      %v1706 = vand.u32 2147483647, %v1705
      %v1708 = vcvt.s32.f32 %v1701
      %v1709 = vmul.f32 %v1708, %v1706
      %v1710 = vxor.u32 %v1709, 2147483648
      %v1711 = vsel %vm1628, %v1710, %v1709
      %v1712 = vsub.s32 4, %v1688
      %v1713 = vsel %vm1628, %v1712, %v1688
      %v1714 = vsel %vm1627, %v374, %v1711
      %v1715 = vsel %vm1627, 0, %v1713
      %v1716 = vcosq.f32.pop %v1714
      %v1717 = vsinq.f32.pop %v1714
      %vm1718 = vweird.f32 %v374
      %v1719 = vadd.s32 %v1715, 3
      %v1720 = vand.u32 %v1719, 3
      %vm1721 = vcmp.lt.s32.totalorder %v1720, 2
      %vm1722 = vcmp.eq.s32.totalorder %v1720, 0
      %v1723 = vxor.u32 %v1717, 2147483648
      %v1724 = vsel %vm1722, %v1716, %v1723
      %vm1725 = vcmp.eq.s32.totalorder %v1720, 2
      %v1726 = vxor.u32 %v1716, 2147483648
      %v1727 = vsel %vm1725, %v1726, %v1717
      %v1728 = vsel %vm1721, %v1724, %v1727
      %v1729 = vsel %vm1718, nan, %v1728
      %v1730 = vand.u32 2147483647, %v375
      %vm1731 = vcmp.le.f32.partialorder %v1730, 0.7853982
      %vm1732 = vcmp.lt.s32.totalorder %v375, 0
      %v1733 = vand.u32 %v375, 2139095040
      %v1734 = vshrl.u32 %v1733, 23
      %v1735 = vsub.s32 %v1734, 127
      %v1736 = vand.u32 2147483647, %v375
      %v1737 = vand.u32 %v1736, 8388607
      %v1738 = vor.u32 %v1737, 8388608
      %v1739 = vsub.s32 0, %v1738
      %v1740 = vadd.s32 %v1735, 1
      %vm1741 = vcmp.gt.s32.totalorder %v1740, 0
      %v1742 = vsel %vm1741, %v1740, 0
      %v1743 = vshrl.u32 %v1742, 5
      %v1744 = vand.u32 %v1742, 31
      %v1745 = vsub.s32 32, %v1744
      %v1746 = vshrl.u32 683565275, %v1745
      %v1747 = vshll.u32 683565275, %v1744
      %v1748 = vshrl.u32 2475754826, %v1745
      %v1749 = vor.u32 %v1747, %v1748
      %v1750 = vshll.u32 2475754826, %v1744
      %v1751 = vshrl.u32 2131351028, %v1745
      %v1752 = vor.u32 %v1750, %v1751
      %v1753 = vshll.u32 2131351028, %v1744
      %v1754 = vshrl.u32 2102212464, %v1745
      %v1755 = vor.u32 %v1753, %v1754
      %v1756 = vshll.u32 2102212464, %v1744
      %v1757 = vshrl.u32 920167782, %v1745
      %v1758 = vor.u32 %v1756, %v1757
      %v1759 = vshll.u32 920167782, %v1744
      %v1760 = vshrl.u32 1326507024, %v1745
      %v1761 = vor.u32 %v1759, %v1760
      %vm1762 = vcmp.lt.s32.totalorder %v1743, 1
      %vm1763 = vcmp.lt.s32.totalorder %v1743, 2
      %vm1764 = vcmp.lt.s32.totalorder %v1743, 3
      %vm1765 = vcmp.lt.s32.totalorder %v1743, 4
      %v1766 = vsel %vm1762, %v1746, %v1749
      %v1767 = vsel %vm1765, %v1755, 2102212464
      %v1768 = vsel %vm1764, %v1752, %v1767
      %v1769 = vsel %vm1763, %v1766, %v1768
      %v1770 = vsel %vm1762, %v1749, %v1752
      %v1771 = vsel %vm1765, %v1758, 920167782
      %v1772 = vsel %vm1764, %v1755, %v1771
      %v1773 = vsel %vm1763, %v1770, %v1772
      %v1774 = vsel %vm1762, %v1752, %v1755
      %v1775 = vsel %vm1765, %v1761, 1326507024
      %v1776 = vsel %vm1764, %v1758, %v1775
      %v1777 = vsel %vm1763, %v1774, %v1776
      %v1778 = vshll.u32 %v1738, 8
      %v1779 = vmul.u32.u64.compose %v1778, %v1777
      %v1780 = vextract.low.u32 %v1779
      %v1781 = vextract.high.u32 %v1779
      %v1782 = vmul.u32.u64.compose %v1778, %v1773
      %v1783 = vextract.low.u32 %v1782
      %v1784 = vextract.high.u32 %v1782
      %v1785 = vmul.u32 %v1778, %v1769
      %v1786 = vadd.s32 %v1781, %v1783
      %vm1787 = vc.u32 %v1781, %v1783
      %v1788 = vadd.s32 %v1784, 1
      %v1789 = vsel %vm1787, %v1788, %v1784
      %v1790 = vadd.s32 %v1785, %v1789
      %v1791 = vadd.s32 %v1790, 536870912
      %v1792 = vshrl.u32 %v1791, 30
      %v1793 = vshll.u32 %v1792, 30
      %v1794 = vsub.s32 %v1790, %v1793
      %vm1795 = vcmp.lt.s32.totalorder %v1794, 0
      %v1796 = vsub.s32 0, %v1794
      %v1797 = vsel %vm1795, %v1796, %v1794
      %v1798 = vclz %v1797
      %v1799 = vsub.s32 %v1798, 2
      %vm1800 = vcmp.gt.s32.totalorder 0, %v1799
      %v1801 = vsel %vm1800, 0, %v1799
      %v1802 = vsub.s32 32, %v1801
      %v1803 = vshll.u32 %v1794, %v1801
      %v1804 = vshrl.u32 %v1786, %v1802
      %v1805 = vor.u32 %v1803, %v1804
      %v1806 = vsub.s32 4294967266, %v1801
      %v1807 = vadd.s32 %v1806, 127
      %v1808 = vshll.u32 %v1807, 23
      %v1809 = vor.u32 4788187, %v1808
      %v1810 = vand.u32 2147483647, %v1809
      %v1812 = vcvt.s32.f32 %v1805
      %v1813 = vmul.f32 %v1812, %v1810
      %v1814 = vxor.u32 %v1813, 2147483648
      %v1815 = vsel %vm1732, %v1814, %v1813
      %v1816 = vsub.s32 4, %v1792
      %v1817 = vsel %vm1732, %v1816, %v1792
      %v1818 = vsel %vm1731, %v375, %v1815
      %v1819 = vsel %vm1731, 0, %v1817
      %v1820 = vcosq.f32.pop %v1818
      %v1821 = vsinq.f32.pop %v1818
      %vm1822 = vweird.f32 %v375
      %v1823 = vadd.s32 %v1819, 3
      %v1824 = vand.u32 %v1823, 3
      %vm1825 = vcmp.lt.s32.totalorder %v1824, 2
      %vm1826 = vcmp.eq.s32.totalorder %v1824, 0
      %v1827 = vxor.u32 %v1821, 2147483648
      %v1828 = vsel %vm1826, %v1820, %v1827
      %vm1829 = vcmp.eq.s32.totalorder %v1824, 2
      %v1830 = vxor.u32 %v1820, 2147483648
      %v1831 = vsel %vm1829, %v1830, %v1821
      %v1832 = vsel %vm1825, %v1828, %v1831
      %v1833 = vsel %vm1822, nan, %v1832
      %v1834 = vand.u32 2147483647, %v376
      %vm1835 = vcmp.le.f32.partialorder %v1834, 0.7853982
      %vm1836 = vcmp.lt.s32.totalorder %v376, 0
      %v1837 = vand.u32 %v376, 2139095040
      %v1838 = vshrl.u32 %v1837, 23
      %v1839 = vsub.s32 %v1838, 127
      %v1840 = vand.u32 2147483647, %v376
      %v1841 = vand.u32 %v1840, 8388607
      %v1842 = vor.u32 %v1841, 8388608
      %v1843 = vsub.s32 0, %v1842
      %v1844 = vadd.s32 %v1839, 1
      %vm1845 = vcmp.gt.s32.totalorder %v1844, 0
      %v1846 = vsel %vm1845, %v1844, 0
      %v1847 = vshrl.u32 %v1846, 5
      %v1848 = vand.u32 %v1846, 31
      %v1849 = vsub.s32 32, %v1848
      %v1850 = vshrl.u32 683565275, %v1849
      %v1851 = vshll.u32 683565275, %v1848
      %v1852 = vshrl.u32 2475754826, %v1849
      %v1853 = vor.u32 %v1851, %v1852
      %v1854 = vshll.u32 2475754826, %v1848
      %v1855 = vshrl.u32 2131351028, %v1849
      %v1856 = vor.u32 %v1854, %v1855
      %v1857 = vshll.u32 2131351028, %v1848
      %v1858 = vshrl.u32 2102212464, %v1849
      %v1859 = vor.u32 %v1857, %v1858
      %v1860 = vshll.u32 2102212464, %v1848
      %v1861 = vshrl.u32 920167782, %v1849
      %v1862 = vor.u32 %v1860, %v1861
      %v1863 = vshll.u32 920167782, %v1848
      %v1864 = vshrl.u32 1326507024, %v1849
      %v1865 = vor.u32 %v1863, %v1864
      %vm1866 = vcmp.lt.s32.totalorder %v1847, 1
      %vm1867 = vcmp.lt.s32.totalorder %v1847, 2
      %vm1868 = vcmp.lt.s32.totalorder %v1847, 3
      %vm1869 = vcmp.lt.s32.totalorder %v1847, 4
      %v1870 = vsel %vm1866, %v1850, %v1853
      %v1871 = vsel %vm1869, %v1859, 2102212464
      %v1872 = vsel %vm1868, %v1856, %v1871
      %v1873 = vsel %vm1867, %v1870, %v1872
      %v1874 = vsel %vm1866, %v1853, %v1856
      %v1875 = vsel %vm1869, %v1862, 920167782
      %v1876 = vsel %vm1868, %v1859, %v1875
      %v1877 = vsel %vm1867, %v1874, %v1876
      %v1878 = vsel %vm1866, %v1856, %v1859
      %v1879 = vsel %vm1869, %v1865, 1326507024
      %v1880 = vsel %vm1868, %v1862, %v1879
      %v1881 = vsel %vm1867, %v1878, %v1880
      %v1882 = vshll.u32 %v1842, 8
      %v1883 = vmul.u32.u64.compose %v1882, %v1881
      %v1884 = vextract.low.u32 %v1883
      %v1885 = vextract.high.u32 %v1883
      %v1886 = vmul.u32.u64.compose %v1882, %v1877
      %v1887 = vextract.low.u32 %v1886
      %v1888 = vextract.high.u32 %v1886
      %v1889 = vmul.u32 %v1882, %v1873
      %v1890 = vadd.s32 %v1885, %v1887
      %vm1891 = vc.u32 %v1885, %v1887
      %v1892 = vadd.s32 %v1888, 1
      %v1893 = vsel %vm1891, %v1892, %v1888
      %v1894 = vadd.s32 %v1889, %v1893
      %v1895 = vadd.s32 %v1894, 536870912
      %v1896 = vshrl.u32 %v1895, 30
      %v1897 = vshll.u32 %v1896, 30
      %v1898 = vsub.s32 %v1894, %v1897
      %vm1899 = vcmp.lt.s32.totalorder %v1898, 0
      %v1900 = vsub.s32 0, %v1898
      %v1901 = vsel %vm1899, %v1900, %v1898
      %v1902 = vclz %v1901
      %v1903 = vsub.s32 %v1902, 2
      %vm1904 = vcmp.gt.s32.totalorder 0, %v1903
      %v1905 = vsel %vm1904, 0, %v1903
      %v1906 = vsub.s32 32, %v1905
      %v1907 = vshll.u32 %v1898, %v1905
      %v1908 = vshrl.u32 %v1890, %v1906
      %v1909 = vor.u32 %v1907, %v1908
      %v1910 = vsub.s32 4294967266, %v1905
      %v1911 = vadd.s32 %v1910, 127
      %v1912 = vshll.u32 %v1911, 23
      %v1913 = vor.u32 4788187, %v1912
      %v1914 = vand.u32 2147483647, %v1913
      %v1916 = vcvt.s32.f32 %v1909
      %v1917 = vmul.f32 %v1916, %v1914
      %v1918 = vxor.u32 %v1917, 2147483648
      %v1919 = vsel %vm1836, %v1918, %v1917
      %v1920 = vsub.s32 4, %v1896
      %v1921 = vsel %vm1836, %v1920, %v1896
      %v1922 = vsel %vm1835, %v376, %v1919
      %v1923 = vsel %vm1835, 0, %v1921
      %v1924 = vcosq.f32.pop %v1922
      %v1925 = vsinq.f32.pop %v1922
      %vm1926 = vweird.f32 %v376
      %v1927 = vadd.s32 %v1923, 3
      %v1928 = vand.u32 %v1927, 3
      %vm1929 = vcmp.lt.s32.totalorder %v1928, 2
      %vm1930 = vcmp.eq.s32.totalorder %v1928, 0
      %v1931 = vxor.u32 %v1925, 2147483648
      %v1932 = vsel %vm1930, %v1924, %v1931
      %vm1933 = vcmp.eq.s32.totalorder %v1928, 2
      %v1934 = vxor.u32 %v1924, 2147483648
      %v1935 = vsel %vm1933, %v1934, %v1925
      %v1936 = vsel %vm1929, %v1932, %v1935
      %v1937 = vsel %vm1926, nan, %v1936
      %v1938 = vand.u32 2147483647, %v377
      %vm1939 = vcmp.le.f32.partialorder %v1938, 0.7853982
      %vm1940 = vcmp.lt.s32.totalorder %v377, 0
      %v1941 = vand.u32 %v377, 2139095040
      %v1942 = vshrl.u32 %v1941, 23
      %v1943 = vsub.s32 %v1942, 127
      %v1944 = vand.u32 2147483647, %v377
      %v1945 = vand.u32 %v1944, 8388607
      %v1946 = vor.u32 %v1945, 8388608
      %v1947 = vsub.s32 0, %v1946
      %v1948 = vadd.s32 %v1943, 1
      %vm1949 = vcmp.gt.s32.totalorder %v1948, 0
      %v1950 = vsel %vm1949, %v1948, 0
      %v1951 = vshrl.u32 %v1950, 5
      %v1952 = vand.u32 %v1950, 31
      %v1953 = vsub.s32 32, %v1952
      %v1954 = vshrl.u32 683565275, %v1953
      %v1955 = vshll.u32 683565275, %v1952
      %v1956 = vshrl.u32 2475754826, %v1953
      %v1957 = vor.u32 %v1955, %v1956
      %v1958 = vshll.u32 2475754826, %v1952
      %v1959 = vshrl.u32 2131351028, %v1953
      %v1960 = vor.u32 %v1958, %v1959
      %v1961 = vshll.u32 2131351028, %v1952
      %v1962 = vshrl.u32 2102212464, %v1953
      %v1963 = vor.u32 %v1961, %v1962
      %v1964 = vshll.u32 2102212464, %v1952
      %v1965 = vshrl.u32 920167782, %v1953
      %v1966 = vor.u32 %v1964, %v1965
      %v1967 = vshll.u32 920167782, %v1952
      %v1968 = vshrl.u32 1326507024, %v1953
      %v1969 = vor.u32 %v1967, %v1968
      %vm1970 = vcmp.lt.s32.totalorder %v1951, 1
      %vm1971 = vcmp.lt.s32.totalorder %v1951, 2
      %vm1972 = vcmp.lt.s32.totalorder %v1951, 3
      %vm1973 = vcmp.lt.s32.totalorder %v1951, 4
      %v1974 = vsel %vm1970, %v1954, %v1957
      %v1975 = vsel %vm1973, %v1963, 2102212464
      %v1976 = vsel %vm1972, %v1960, %v1975
      %v1977 = vsel %vm1971, %v1974, %v1976
      %v1978 = vsel %vm1970, %v1957, %v1960
      %v1979 = vsel %vm1973, %v1966, 920167782
      %v1980 = vsel %vm1972, %v1963, %v1979
      %v1981 = vsel %vm1971, %v1978, %v1980
      %v1982 = vsel %vm1970, %v1960, %v1963
      %v1983 = vsel %vm1973, %v1969, 1326507024
      %v1984 = vsel %vm1972, %v1966, %v1983
      %v1985 = vsel %vm1971, %v1982, %v1984
      %v1986 = vshll.u32 %v1946, 8
      %v1987 = vmul.u32.u64.compose %v1986, %v1985
      %v1988 = vextract.low.u32 %v1987
      %v1989 = vextract.high.u32 %v1987
      %v1990 = vmul.u32.u64.compose %v1986, %v1981
      %v1991 = vextract.low.u32 %v1990
      %v1992 = vextract.high.u32 %v1990
      %v1993 = vmul.u32 %v1986, %v1977
      %v1994 = vadd.s32 %v1989, %v1991
      %vm1995 = vc.u32 %v1989, %v1991
      %v1996 = vadd.s32 %v1992, 1
      %v1997 = vsel %vm1995, %v1996, %v1992
      %v1998 = vadd.s32 %v1993, %v1997
      %v1999 = vadd.s32 %v1998, 536870912
      %v2000 = vshrl.u32 %v1999, 30
      %v2001 = vshll.u32 %v2000, 30
      %v2002 = vsub.s32 %v1998, %v2001
      %vm2003 = vcmp.lt.s32.totalorder %v2002, 0
      %v2004 = vsub.s32 0, %v2002
      %v2005 = vsel %vm2003, %v2004, %v2002
      %v2006 = vclz %v2005
      %v2007 = vsub.s32 %v2006, 2
      %vm2008 = vcmp.gt.s32.totalorder 0, %v2007
      %v2009 = vsel %vm2008, 0, %v2007
      %v2010 = vsub.s32 32, %v2009
      %v2011 = vshll.u32 %v2002, %v2009
      %v2012 = vshrl.u32 %v1994, %v2010
      %v2013 = vor.u32 %v2011, %v2012
      %v2014 = vsub.s32 4294967266, %v2009
      %v2015 = vadd.s32 %v2014, 127
      %v2016 = vshll.u32 %v2015, 23
      %v2017 = vor.u32 4788187, %v2016
      %v2018 = vand.u32 2147483647, %v2017
      %v2020 = vcvt.s32.f32 %v2013
      %v2021 = vmul.f32 %v2020, %v2018
      %v2022 = vxor.u32 %v2021, 2147483648
      %v2023 = vsel %vm1940, %v2022, %v2021
      %v2024 = vsub.s32 4, %v2000
      %v2025 = vsel %vm1940, %v2024, %v2000
      %v2026 = vsel %vm1939, %v377, %v2023
      %v2027 = vsel %vm1939, 0, %v2025
      %v2028 = vcosq.f32.pop %v2026
      %v2029 = vsinq.f32.pop %v2026
      %vm2030 = vweird.f32 %v377
      %v2031 = vadd.s32 %v2027, 3
      %v2032 = vand.u32 %v2031, 3
      %vm2033 = vcmp.lt.s32.totalorder %v2032, 2
      %vm2034 = vcmp.eq.s32.totalorder %v2032, 0
      %v2035 = vxor.u32 %v2029, 2147483648
      %v2036 = vsel %vm2034, %v2028, %v2035
      %vm2037 = vcmp.eq.s32.totalorder %v2032, 2
      %v2038 = vxor.u32 %v2028, 2147483648
      %v2039 = vsel %vm2037, %v2038, %v2029
      %v2040 = vsel %vm2033, %v2036, %v2039
      %v2041 = vsel %vm2030, nan, %v2040
      %2042 = vst [vmem:[#allocation9] sm:$0xff] %v481
      %2043 = vst [vmem:[#allocation9 + $0x8] sm:$0xff] %v585
      %2044 = vst [vmem:[#allocation9 + $0x10] sm:$0xff] %v689
      %2045 = vst [vmem:[#allocation9 + $0x18] sm:$0xff] %v793
      %2046 = vst [vmem:[#allocation9 + $0x20] sm:$0xff] %v897
      %2047 = vst [vmem:[#allocation9 + $0x28] sm:$0xff] %v1001
      %2048 = vst [vmem:[#allocation9 + $0x30] sm:$0xff] %v1105
      %2049 = vst [vmem:[#allocation9 + $0x38] sm:$0xff] %v1209
      %2050 = vst [vmem:[#allocation9 + $0x40] sm:$0xff] %v1313
      %2051 = vst [vmem:[#allocation9 + $0x48] sm:$0xff] %v1417
      %2052 = vst [vmem:[#allocation9 + $0x50] sm:$0xff] %v1521
      %2053 = vst [vmem:[#allocation9 + $0x58] sm:$0xff] %v1625
      %2054 = vst [vmem:[#allocation9 + $0x60] sm:$0xff] %v1729
      %2055 = vst [vmem:[#allocation9 + $0x68] sm:$0xff] %v1833
      %2056 = vst [vmem:[#allocation9 + $0x70] sm:$0xff] %v1937
      %2057 = vst [vmem:[#allocation9 + $0x78] sm:$0xff] %v2041
    $region33: #{tpu_custom_call.1} parent=1 // pred_fallthru
      _
    // Predicated region
    $region34: #{tpu_custom_call.1} parent=1 // pred_check
      _
    $region35: #{tpu_custom_call.1} parent=1 // pred_check_branch
      %2059 = sbr.rel (0) target = $region37
    $region36: #{tpu_custom_call.1} parent=1 // pred_region
      %s2061 = ssub.s32 2048, 2048
      %2062 = vsyncadd [#allocation5], %s2061
      %s2063 = sshll.u32 [#allocation9], 4
      %s2064 = int_to_ptr.vmem [resolvable:$true] %s2063
      %2069 = dma.vmem_to_hbm [thread:$0]  %s2064, 2048, %s3, [#allocation5], 128, 128, 8
    $region37: #{tpu_custom_call.1} parent=1 // pred_fallthru
      _
    // Predicated region
    $region38: #{tpu_custom_call.1} parent=1 // pred_check
      _
    $region39: #{tpu_custom_call.1} parent=1 // pred_check_branch
      %2071 = sbr.rel (0) target = $region41
    $region40: #{tpu_custom_call.1} parent=1 // pred_region
      %2072 = dma.done [#allocation5], 2048
    $region41: #{tpu_custom_call.1} parent=1 // pred_fallthru
      _
    %2073 = vsyncpa [#allocation4], 1
    %2074 = vsyncpa [#allocation7], 1
    %2075 = vsyncpa [#allocation5], 1

</llo_original>
